<compile_context>
chip_gen: v7x
topology: tpu7x:2x2x1
jax: 0.10.0
libtpu: 0.0.40
codegen_flags: <defaults>
</compile_context>

<pallas_src>
import jax
import jax.numpy as jnp
from jax.experimental import pallas as pl
from jax.experimental.pallas import tpu as pltpu


def _round_up(n, m):
    return ((n + m - 1) // m) * m


def _pad_gate_cols(w, H, Hp):
    """(..., 4H) -> (..., 4Hp): put each PyTorch gate block into its own 128-lane-aligned slab."""
    lead = w.shape[:-1]
    w4 = w.reshape(*lead, 4, H)
    w4 = jnp.pad(w4, [(0, 0)] * len(lead) + [(0, 0), (0, Hp - H)])
    return w4.reshape(*lead, 4 * Hp)


def _lstm_kernel(lengths_ref, x_ref, wih_ref, whh_ref, b_ref, wout_ref, bout_ref,
                 out_ref, xg_sc):
    """Whole SketchLSTM forward in one invocation (no time grid).

    x_ref:    (T*Bp, I)   time-major, batch padded to a sublane multiple (compute dtype)
    wih_ref:  (I, 4Hp)    whh_ref: (Hp, 4Hp)   b_ref: (1, 4Hp) f32  (gate slabs lane-aligned)
    wout_ref: (Hp, Op)    bout_ref: (1, Op) f32
    xg_sc:    (T, Bp, 4Hp) f32 scratch — precomputed x @ w_ih + b for all timesteps
    """
    T, Bp, G = xg_sc.shape
    Hp = G // 4

    # Non-recurrent input projection: one large MXU matmul for all T timesteps.
    xg = jnp.dot(x_ref[...], wih_ref[...], preferred_element_type=jnp.float32) + b_ref[...]
    xg_sc[...] = xg.reshape(T, Bp, G)      # no-op relayout (Bp multiple of 8, G multiple of 128)

    last_t = lengths_ref[...] - 1          # (Bp, 1) int32

    def step(t, carry):
        h, c, last = carry                 # (Bp, Hp) f32 each — vreg-resident, not scratch
        # Only the recurrent h @ w_hh matmul remains on the serial path.
        gates = xg_sc[t] + jnp.dot(h.astype(whh_ref.dtype), whh_ref[...],
                                   preferred_element_type=jnp.float32)     # (Bp, 4Hp) f32
        # Gate slabs are 128-lane aligned -> cheap full-vreg slices. PyTorch order [i, f, g, o].
        i_g = jax.nn.sigmoid(gates[:, 0 * Hp:1 * Hp])
        f_g = jax.nn.sigmoid(gates[:, 1 * Hp:2 * Hp])
        g_g = jnp.tanh(gates[:, 2 * Hp:3 * Hp])
        o_g = jax.nn.sigmoid(gates[:, 3 * Hp:4 * Hp])

        c_new = f_g * c + i_g * g_g
        h_new = o_g * jnp.tanh(c_new)
        # torch.gather(out_h, 1, lengths - 1): latch h at each sequence's last valid step.
        last_new = jnp.where(last_t == t, h_new, last)
        return (h_new, c_new, last_new)

    zeros = jnp.zeros((Bp, Hp), jnp.float32)
    # T is small & static: full unroll for LLO scheduler visibility.
    _, _, last = jax.lax.fori_loop(0, T, step, (zeros, zeros, zeros), unroll=True)

    out = jnp.dot(last.astype(wout_ref.dtype), wout_ref[...],
                  preferred_element_type=jnp.float32) + bout_ref[...]
    out_ref[...] = out.astype(out_ref.dtype)


def sketch_lstm_forward(x, lengths, params, *, compute_dtype=jnp.float32):
    """x: (B, T, I) float32 (batch_first, torch convention); lengths: (B,) int.

    compute_dtype: dtype for the matmul operands (weights, x, h). Use jnp.bfloat16 on
    v5e/v6e/v7x for MXU throughput + halved weight DMA; gate math / accumulation stay f32.
    """
    B, T, I = x.shape
    H = params["whh_t"].shape[0]
    O = params["wout_t"].shape[1]

    LANES, SUBLANES = 128, 8
    Hp = _round_up(H, LANES)     # lane-pad each gate slab (and h/c state)
    Op = _round_up(O, LANES)     # lane-dense output store
    Bp = _round_up(B, SUBLANES)  # fill vreg sublanes / MXU rows

    # ---- non-recurrent data prep (plain XLA, outside the serial kernel) ----
    x_tm = jnp.transpose(x, (1, 0, 2))                      # (T, B, I) time-major
    x_tm = jnp.pad(x_tm, ((0, 0), (0, Bp - B), (0, 0)))     # (T, Bp, I)
    x_flat = x_tm.reshape(T * Bp, I).astype(compute_dtype)  # one big matmul in-kernel

    wih = _pad_gate_cols(params["wih_t"], H, Hp).astype(compute_dtype)                  # (I, 4Hp)
    whh = _pad_gate_cols(jnp.pad(params["whh_t"], ((0, Hp - H), (0, 0))), H, Hp)
    whh = whh.astype(compute_dtype)                                                     # (Hp, 4Hp)
    b = _pad_gate_cols(params["b"], H, Hp).astype(jnp.float32)                          # (1, 4Hp)
    wout = jnp.pad(params["wout_t"], ((0, Hp - H), (0, Op - O))).astype(compute_dtype)  # (Hp, Op)
    bout = jnp.pad(params["bout"], ((0, 0), (0, Op - O))).astype(jnp.float32)           # (1, Op)

    # torch.gather with index lengths-1 assumes lengths >= 1; clamp defensively.
    lens = jnp.clip(lengths.astype(jnp.int32), 1, T)
    lens = jnp.pad(lens, (0, Bp - B), constant_values=1).reshape(Bp, 1)

    out_padded = pl.pallas_call(
        _lstm_kernel,
        out_shape=jax.ShapeDtypeStruct((Bp, Op), jnp.float32),
        scratch_shapes=[
            pltpu.VMEM((T, Bp, 4 * Hp), jnp.float32),   # precomputed x @ w_ih + b
        ],
    )(lens, x_flat, wih, whh, b, wout, bout)

    return out_padded[:B, :O]


def init_params(key, input_size, hidden_size, output_size):
    """Deterministic init mimicking torch defaults: U(-1/sqrt(H), 1/sqrt(H))."""
    k = 1.0 / jnp.sqrt(jnp.float32(hidden_size))
    ks = jax.random.split(key, 7)
    u = lambda kk, shp: jax.random.uniform(kk, shp, jnp.float32, -k, k)
    wih = u(ks[0], (4 * hidden_size, input_size))
    whh = u(ks[1], (4 * hidden_size, hidden_size))
    b_ih = u(ks[2], (4 * hidden_size,))
    b_hh = u(ks[3], (4 * hidden_size,))
    wout = u(ks[4], (output_size, hidden_size))
    bout = u(ks[5], (output_size,))
    return {
        "wih_t": wih.T,                         # (I, 4H)
        "whh_t": whh.T,                         # (H, 4H)
        "b": (b_ih + b_hh).reshape(1, -1),      # (1, 4H)
        "wout_t": wout.T,                       # (H, O)
        "bout": bout.reshape(1, -1),            # (1, O)
    }


def reference_forward(x, lengths, p):
    """Pure-JAX reference (lax.scan LSTM) for correctness check."""
    B, T, I = x.shape
    H = p["whh_t"].shape[0]

    def step(carry, x_t):
        h, c = carry
        gates = x_t @ p["wih_t"] + h @ p["whh_t"] + p["b"][0]
        i = jax.nn.sigmoid(gates[:, :H])
        f = jax.nn.sigmoid(gates[:, H:2 * H])
        g = jnp.tanh(gates[:, 2 * H:3 * H])
        o = jax.nn.sigmoid(gates[:, 3 * H:])
        c = f * c + i * g
        h = o * jnp.tanh(c)
        return (h, c), h

    init = (jnp.zeros((B, H), jnp.float32), jnp.zeros((B, H), jnp.float32))
    _, hs = jax.lax.scan(step, init, jnp.transpose(x, (1, 0, 2)))   # (T, B, H)
    last = hs[lengths - 1, jnp.arange(B)]                           # (B, H)
    return last @ p["wout_t"] + p["bout"][0]


if __name__ == "__main__":
    # Small shapes consistent with a sketch-stroke LSTM.
    B, T, I, H, O = 2, 8, 5, 32, 10

    key = jax.random.PRNGKey(0)
    k_x, k_p = jax.random.split(key)
    x = jax.random.normal(k_x, (B, T, I), jnp.float32)
    lengths = jnp.array([T, T - 3], dtype=jnp.int32)   # variable-length sequences
    params = init_params(k_p, I, H, O)

    # f32 path: strict check against the pure-JAX reference.
    out = jax.block_until_ready(sketch_lstm_forward(x, lengths, params))
    ref = reference_forward(x, lengths, params)
    assert out.shape == (B, O)
    assert jnp.allclose(out, ref, rtol=1e-4, atol=1e-3), (out, ref)

    # bf16 weight/activation path (v5e/v6e/v7x recommendation): loose check (bf16 rounding).
    out_bf16 = jax.block_until_ready(
        sketch_lstm_forward(x, lengths, params, compute_dtype=jnp.bfloat16))
    assert out_bf16.shape == (B, O)
    assert bool(jnp.all(jnp.isfinite(out_bf16)))
    assert float(jnp.max(jnp.abs(out_bf16 - ref))) < 0.25

    print("KERNEL_OK")
</pallas_src>

<mosaic_0001>
module attributes {stable_mosaic.version = 11 : i64} {
  func.func @_lstm_kernel(%arg0: memref<8x1xi32, #tpu.memory_space<vmem>>, %arg1: memref<64x5xf32, #tpu.memory_space<vmem>>, %arg2: memref<5x512xf32, #tpu.memory_space<vmem>>, %arg3: memref<128x512xf32, #tpu.memory_space<vmem>>, %arg4: memref<1x512xf32, #tpu.memory_space<vmem>>, %arg5: memref<128x128xf32, #tpu.memory_space<vmem>>, %arg6: memref<1x128xf32, #tpu.memory_space<vmem>>, %arg7: memref<8x128xf32, #tpu.memory_space<vmem>>, %arg8: memref<8x8x512xf32, #tpu.memory_space<vmem>>) attributes {dimension_semantics = [], scalar_prefetch = 0 : i64, scratch_operands = 1 : i64, tpu.core_type = #tpu.core_type<tc>} {
    %c0 = arith.constant 0 : index
    %c0_0 = arith.constant 0 : index
    %0 = vector.load %arg1[%c0, %c0_0] : memref<64x5xf32, #tpu.memory_space<vmem>>, vector<64x5xf32>
    %c0_1 = arith.constant 0 : index
    %c0_2 = arith.constant 0 : index
    %1 = vector.load %arg2[%c0_1, %c0_2] : memref<5x512xf32, #tpu.memory_space<vmem>>, vector<5x512xf32>
    %cst = arith.constant dense<0.000000e+00> : vector<64x512xf32>
    %2 = tpu.matmul %0, %1, %cst {dimension_numbers = #tpu.dot_dimension_numbers<[1], [0], [0], [1], [0, 0, 1, 1], [], []>} : vector<64x5xf32>, vector<5x512xf32>, vector<64x512xf32> -> vector<64x512xf32>
    %c0_3 = arith.constant 0 : index
    %c0_4 = arith.constant 0 : index
    %3 = vector.load %arg4[%c0_3, %c0_4] : memref<1x512xf32, #tpu.memory_space<vmem>>, vector<1x512xf32>
    %4 = vector.broadcast %3 : vector<1x512xf32> to vector<64x512xf32>
    %5 = arith.addf %2, %4 : vector<64x512xf32>
    %6 = vector.shape_cast %5 : vector<64x512xf32> to vector<8x8x512xf32>
    %c0_5 = arith.constant 0 : index
    %c0_6 = arith.constant 0 : index
    %c0_7 = arith.constant 0 : index
    %7 = vector.load %arg8[%c0_5, %c0_6, %c0_7] : memref<8x8x512xf32, #tpu.memory_space<vmem>>, vector<8x8x512xf32>
    tpu.vector_store %arg8[%c0_5, %c0_6, %c0_7], %6 {strides = array<i32>} : memref<8x8x512xf32, #tpu.memory_space<vmem>>, vector<8x8x512xf32>,
    %c0_8 = arith.constant 0 : index
    %c0_9 = arith.constant 0 : index
    %8 = vector.load %arg0[%c0_8, %c0_9] : memref<8x1xi32, #tpu.memory_space<vmem>>, vector<8x1xi32>
    %c1_i32 = arith.constant 1 : i32
    %9 = vector.broadcast %c1_i32 : i32 to vector<8x1xi32>
    %10 = arith.subi %8, %9 : vector<8x1xi32>
    %cst_10 = arith.constant 0.000000e+00 : f32
    %11 = vector.broadcast %cst_10 : f32 to vector<8x128xf32>
    %c0_i32 = arith.constant 0 : i32
    %12 = arith.index_cast %c0_i32 : i32 to index
    %c0_11 = arith.constant 0 : index
    %c0_12 = arith.constant 0 : index
    %13 = vector.load %arg8[%12, %c0_11, %c0_12] : memref<8x8x512xf32, #tpu.memory_space<vmem>>, vector<1x8x512xf32>
    %14 = vector.shape_cast %13 : vector<1x8x512xf32> to vector<8x512xf32>
    %c0_13 = arith.constant 0 : index
    %c0_14 = arith.constant 0 : index
    %15 = vector.load %arg3[%c0_13, %c0_14] : memref<128x512xf32, #tpu.memory_space<vmem>>, vector<128x512xf32>
    %cst_15 = arith.constant dense<0.000000e+00> : vector<8x512xf32>
    %16 = tpu.matmul %11, %15, %cst_15 {dimension_numbers = #tpu.dot_dimension_numbers<[1], [0], [0], [1], [0, 0, 1, 1], [], []>} : vector<8x128xf32>, vector<128x512xf32>, vector<8x512xf32> -> vector<8x512xf32>
    %17 = arith.addf %14, %16 : vector<8x512xf32>
    %18 = vector.extract_strided_slice %17 {offsets = [0, 0], sizes = [8, 128], strides = [1, 1]} : vector<8x512xf32> to vector<8x128xf32>
    %19 = arith.negf %18 : vector<8x128xf32>
    %20 = math.exp %19 : vector<8x128xf32>
    %cst_16 = arith.constant 1.000000e+00 : f32
    %21 = vector.broadcast %cst_16 : f32 to vector<8x128xf32>
    %22 = arith.addf %21, %20 : vector<8x128xf32>
    %23 = arith.divf %21, %22 : vector<8x128xf32>
    %24 = vector.extract_strided_slice %17 {offsets = [0, 128], sizes = [8, 128], strides = [1, 1]} : vector<8x512xf32> to vector<8x128xf32>
    %25 = arith.negf %24 : vector<8x128xf32>
    %26 = math.exp %25 : vector<8x128xf32>
    %cst_17 = arith.constant 1.000000e+00 : f32
    %27 = vector.broadcast %cst_17 : f32 to vector<8x128xf32>
    %28 = arith.addf %27, %26 : vector<8x128xf32>
    %29 = arith.divf %27, %28 : vector<8x128xf32>
    %30 = vector.extract_strided_slice %17 {offsets = [0, 256], sizes = [8, 128], strides = [1, 1]} : vector<8x512xf32> to vector<8x128xf32>
    %31 = math.tanh %30 : vector<8x128xf32>
    %32 = vector.extract_strided_slice %17 {offsets = [0, 384], sizes = [8, 128], strides = [1, 1]} : vector<8x512xf32> to vector<8x128xf32>
    %33 = arith.negf %32 : vector<8x128xf32>
    %34 = math.exp %33 : vector<8x128xf32>
    %cst_18 = arith.constant 1.000000e+00 : f32
    %35 = vector.broadcast %cst_18 : f32 to vector<8x128xf32>
    %36 = arith.addf %35, %34 : vector<8x128xf32>
    %37 = arith.divf %35, %36 : vector<8x128xf32>
    %38 = arith.mulf %29, %11 : vector<8x128xf32>
    %39 = arith.mulf %23, %31 : vector<8x128xf32>
    %40 = arith.addf %38, %39 : vector<8x128xf32>
    %41 = math.tanh %40 : vector<8x128xf32>
    %42 = arith.mulf %37, %41 : vector<8x128xf32>
    %43 = vector.broadcast %c0_i32 : i32 to vector<8x1xi32>
    %44 = arith.cmpi eq, %10, %43 : vector<8x1xi32>
    %45 = vector.shape_cast %44 : vector<8x1xi1> to vector<8x1xi1>
    %46 = vector.broadcast %45 : vector<8x1xi1> to vector<8x128xi1>
    %47 = arith.select %46, %42, %11 : vector<8x128xi1>, vector<8x128xf32>
    %c1_i32_19 = arith.constant 1 : i32
    %48 = arith.index_cast %c1_i32_19 : i32 to index
    %c0_20 = arith.constant 0 : index
    %c0_21 = arith.constant 0 : index
    %49 = vector.load %arg8[%48, %c0_20, %c0_21] : memref<8x8x512xf32, #tpu.memory_space<vmem>>, vector<1x8x512xf32>
    %50 = vector.shape_cast %49 : vector<1x8x512xf32> to vector<8x512xf32>
    %c0_22 = arith.constant 0 : index
    %c0_23 = arith.constant 0 : index
    %51 = vector.load %arg3[%c0_22, %c0_23] : memref<128x512xf32, #tpu.memory_space<vmem>>, vector<128x512xf32>
    %cst_24 = arith.constant dense<0.000000e+00> : vector<8x512xf32>
    %52 = tpu.matmul %42, %51, %cst_24 {dimension_numbers = #tpu.dot_dimension_numbers<[1], [0], [0], [1], [0, 0, 1, 1], [], []>} : vector<8x128xf32>, vector<128x512xf32>, vector<8x512xf32> -> vector<8x512xf32>
    %53 = arith.addf %50, %52 : vector<8x512xf32>
    %54 = vector.extract_strided_slice %53 {offsets = [0, 0], sizes = [8, 128], strides = [1, 1]} : vector<8x512xf32> to vector<8x128xf32>
    %55 = arith.negf %54 : vector<8x128xf32>
    %56 = math.exp %55 : vector<8x128xf32>
    %cst_25 = arith.constant 1.000000e+00 : f32
    %57 = vector.broadcast %cst_25 : f32 to vector<8x128xf32>
    %58 = arith.addf %57, %56 : vector<8x128xf32>
    %59 = arith.divf %57, %58 : vector<8x128xf32>
    %60 = vector.extract_strided_slice %53 {offsets = [0, 128], sizes = [8, 128], strides = [1, 1]} : vector<8x512xf32> to vector<8x128xf32>
    %61 = arith.negf %60 : vector<8x128xf32>
    %62 = math.exp %61 : vector<8x128xf32>
    %cst_26 = arith.constant 1.000000e+00 : f32
    %63 = vector.broadcast %cst_26 : f32 to vector<8x128xf32>
    %64 = arith.addf %63, %62 : vector<8x128xf32>
    %65 = arith.divf %63, %64 : vector<8x128xf32>
    %66 = vector.extract_strided_slice %53 {offsets = [0, 256], sizes = [8, 128], strides = [1, 1]} : vector<8x512xf32> to vector<8x128xf32>
    %67 = math.tanh %66 : vector<8x128xf32>
    %68 = vector.extract_strided_slice %53 {offsets = [0, 384], sizes = [8, 128], strides = [1, 1]} : vector<8x512xf32> to vector<8x128xf32>
    %69 = arith.negf %68 : vector<8x128xf32>
    %70 = math.exp %69 : vector<8x128xf32>
    %cst_27 = arith.constant 1.000000e+00 : f32
    %71 = vector.broadcast %cst_27 : f32 to vector<8x128xf32>
    %72 = arith.addf %71, %70 : vector<8x128xf32>
    %73 = arith.divf %71, %72 : vector<8x128xf32>
    %74 = arith.mulf %65, %40 : vector<8x128xf32>
    %75 = arith.mulf %59, %67 : vector<8x128xf32>
    %76 = arith.addf %74, %75 : vector<8x128xf32>
    %77 = math.tanh %76 : vector<8x128xf32>
    %78 = arith.mulf %73, %77 : vector<8x128xf32>
    %79 = vector.broadcast %c1_i32_19 : i32 to vector<8x1xi32>
    %80 = arith.cmpi eq, %10, %79 : vector<8x1xi32>
    %81 = vector.shape_cast %80 : vector<8x1xi1> to vector<8x1xi1>
    %82 = vector.broadcast %81 : vector<8x1xi1> to vector<8x128xi1>
    %83 = arith.select %82, %78, %47 : vector<8x128xi1>, vector<8x128xf32>
    %c2_i32 = arith.constant 2 : i32
    %84 = arith.index_cast %c2_i32 : i32 to index
    %c0_28 = arith.constant 0 : index
    %c0_29 = arith.constant 0 : index
    %85 = vector.load %arg8[%84, %c0_28, %c0_29] : memref<8x8x512xf32, #tpu.memory_space<vmem>>, vector<1x8x512xf32>
    %86 = vector.shape_cast %85 : vector<1x8x512xf32> to vector<8x512xf32>
    %c0_30 = arith.constant 0 : index
    %c0_31 = arith.constant 0 : index
    %87 = vector.load %arg3[%c0_30, %c0_31] : memref<128x512xf32, #tpu.memory_space<vmem>>, vector<128x512xf32>
    %cst_32 = arith.constant dense<0.000000e+00> : vector<8x512xf32>
    %88 = tpu.matmul %78, %87, %cst_32 {dimension_numbers = #tpu.dot_dimension_numbers<[1], [0], [0], [1], [0, 0, 1, 1], [], []>} : vector<8x128xf32>, vector<128x512xf32>, vector<8x512xf32> -> vector<8x512xf32>
    %89 = arith.addf %86, %88 : vector<8x512xf32>
    %90 = vector.extract_strided_slice %89 {offsets = [0, 0], sizes = [8, 128], strides = [1, 1]} : vector<8x512xf32> to vector<8x128xf32>
    %91 = arith.negf %90 : vector<8x128xf32>
    %92 = math.exp %91 : vector<8x128xf32>
    %cst_33 = arith.constant 1.000000e+00 : f32
    %93 = vector.broadcast %cst_33 : f32 to vector<8x128xf32>
    %94 = arith.addf %93, %92 : vector<8x128xf32>
    %95 = arith.divf %93, %94 : vector<8x128xf32>
    %96 = vector.extract_strided_slice %89 {offsets = [0, 128], sizes = [8, 128], strides = [1, 1]} : vector<8x512xf32> to vector<8x128xf32>
    %97 = arith.negf %96 : vector<8x128xf32>
    %98 = math.exp %97 : vector<8x128xf32>
    %cst_34 = arith.constant 1.000000e+00 : f32
    %99 = vector.broadcast %cst_34 : f32 to vector<8x128xf32>
    %100 = arith.addf %99, %98 : vector<8x128xf32>
    %101 = arith.divf %99, %100 : vector<8x128xf32>
    %102 = vector.extract_strided_slice %89 {offsets = [0, 256], sizes = [8, 128], strides = [1, 1]} : vector<8x512xf32> to vector<8x128xf32>
    %103 = math.tanh %102 : vector<8x128xf32>
    %104 = vector.extract_strided_slice %89 {offsets = [0, 384], sizes = [8, 128], strides = [1, 1]} : vector<8x512xf32> to vector<8x128xf32>
    %105 = arith.negf %104 : vector<8x128xf32>
    %106 = math.exp %105 : vector<8x128xf32>
    %cst_35 = arith.constant 1.000000e+00 : f32
    %107 = vector.broadcast %cst_35 : f32 to vector<8x128xf32>
    %108 = arith.addf %107, %106 : vector<8x128xf32>
    %109 = arith.divf %107, %108 : vector<8x128xf32>
    %110 = arith.mulf %101, %76 : vector<8x128xf32>
    %111 = arith.mulf %95, %103 : vector<8x128xf32>
    %112 = arith.addf %110, %111 : vector<8x128xf32>
    %113 = math.tanh %112 : vector<8x128xf32>
    %114 = arith.mulf %109, %113 : vector<8x128xf32>
    %115 = vector.broadcast %c2_i32 : i32 to vector<8x1xi32>
    %116 = arith.cmpi eq, %10, %115 : vector<8x1xi32>
    %117 = vector.shape_cast %116 : vector<8x1xi1> to vector<8x1xi1>
    %118 = vector.broadcast %117 : vector<8x1xi1> to vector<8x128xi1>
    %119 = arith.select %118, %114, %83 : vector<8x128xi1>, vector<8x128xf32>
    %c3_i32 = arith.constant 3 : i32
    %120 = arith.index_cast %c3_i32 : i32 to index
    %c0_36 = arith.constant 0 : index
    %c0_37 = arith.constant 0 : index
    %121 = vector.load %arg8[%120, %c0_36, %c0_37] : memref<8x8x512xf32, #tpu.memory_space<vmem>>, vector<1x8x512xf32>
    %122 = vector.shape_cast %121 : vector<1x8x512xf32> to vector<8x512xf32>
    %c0_38 = arith.constant 0 : index
    %c0_39 = arith.constant 0 : index
    %123 = vector.load %arg3[%c0_38, %c0_39] : memref<128x512xf32, #tpu.memory_space<vmem>>, vector<128x512xf32>
    %cst_40 = arith.constant dense<0.000000e+00> : vector<8x512xf32>
    %124 = tpu.matmul %114, %123, %cst_40 {dimension_numbers = #tpu.dot_dimension_numbers<[1], [0], [0], [1], [0, 0, 1, 1], [], []>} : vector<8x128xf32>, vector<128x512xf32>, vector<8x512xf32> -> vector<8x512xf32>
    %125 = arith.addf %122, %124 : vector<8x512xf32>
    %126 = vector.extract_strided_slice %125 {offsets = [0, 0], sizes = [8, 128], strides = [1, 1]} : vector<8x512xf32> to vector<8x128xf32>
    %127 = arith.negf %126 : vector<8x128xf32>
    %128 = math.exp %127 : vector<8x128xf32>
    %cst_41 = arith.constant 1.000000e+00 : f32
    %129 = vector.broadcast %cst_41 : f32 to vector<8x128xf32>
    %130 = arith.addf %129, %128 : vector<8x128xf32>
    %131 = arith.divf %129, %130 : vector<8x128xf32>
    %132 = vector.extract_strided_slice %125 {offsets = [0, 128], sizes = [8, 128], strides = [1, 1]} : vector<8x512xf32> to vector<8x128xf32>
    %133 = arith.negf %132 : vector<8x128xf32>
    %134 = math.exp %133 : vector<8x128xf32>
    %cst_42 = arith.constant 1.000000e+00 : f32
    %135 = vector.broadcast %cst_42 : f32 to vector<8x128xf32>
    %136 = arith.addf %135, %134 : vector<8x128xf32>
    %137 = arith.divf %135, %136 : vector<8x128xf32>
    %138 = vector.extract_strided_slice %125 {offsets = [0, 256], sizes = [8, 128], strides = [1, 1]} : vector<8x512xf32> to vector<8x128xf32>
    %139 = math.tanh %138 : vector<8x128xf32>
    %140 = vector.extract_strided_slice %125 {offsets = [0, 384], sizes = [8, 128], strides = [1, 1]} : vector<8x512xf32> to vector<8x128xf32>
    %141 = arith.negf %140 : vector<8x128xf32>
    %142 = math.exp %141 : vector<8x128xf32>
    %cst_43 = arith.constant 1.000000e+00 : f32
    %143 = vector.broadcast %cst_43 : f32 to vector<8x128xf32>
    %144 = arith.addf %143, %142 : vector<8x128xf32>
    %145 = arith.divf %143, %144 : vector<8x128xf32>
    %146 = arith.mulf %137, %112 : vector<8x128xf32>
    %147 = arith.mulf %131, %139 : vector<8x128xf32>
    %148 = arith.addf %146, %147 : vector<8x128xf32>
    %149 = math.tanh %148 : vector<8x128xf32>
    %150 = arith.mulf %145, %149 : vector<8x128xf32>
    %151 = vector.broadcast %c3_i32 : i32 to vector<8x1xi32>
    %152 = arith.cmpi eq, %10, %151 : vector<8x1xi32>
    %153 = vector.shape_cast %152 : vector<8x1xi1> to vector<8x1xi1>
    %154 = vector.broadcast %153 : vector<8x1xi1> to vector<8x128xi1>
    %155 = arith.select %154, %150, %119 : vector<8x128xi1>, vector<8x128xf32>
    %c4_i32 = arith.constant 4 : i32
    %156 = arith.index_cast %c4_i32 : i32 to index
    %c0_44 = arith.constant 0 : index
    %c0_45 = arith.constant 0 : index
    %157 = vector.load %arg8[%156, %c0_44, %c0_45] : memref<8x8x512xf32, #tpu.memory_space<vmem>>, vector<1x8x512xf32>
    %158 = vector.shape_cast %157 : vector<1x8x512xf32> to vector<8x512xf32>
    %c0_46 = arith.constant 0 : index
    %c0_47 = arith.constant 0 : index
    %159 = vector.load %arg3[%c0_46, %c0_47] : memref<128x512xf32, #tpu.memory_space<vmem>>, vector<128x512xf32>
    %cst_48 = arith.constant dense<0.000000e+00> : vector<8x512xf32>
    %160 = tpu.matmul %150, %159, %cst_48 {dimension_numbers = #tpu.dot_dimension_numbers<[1], [0], [0], [1], [0, 0, 1, 1], [], []>} : vector<8x128xf32>, vector<128x512xf32>, vector<8x512xf32> -> vector<8x512xf32>
    %161 = arith.addf %158, %160 : vector<8x512xf32>
    %162 = vector.extract_strided_slice %161 {offsets = [0, 0], sizes = [8, 128], strides = [1, 1]} : vector<8x512xf32> to vector<8x128xf32>
    %163 = arith.negf %162 : vector<8x128xf32>
    %164 = math.exp %163 : vector<8x128xf32>
    %cst_49 = arith.constant 1.000000e+00 : f32
    %165 = vector.broadcast %cst_49 : f32 to vector<8x128xf32>
    %166 = arith.addf %165, %164 : vector<8x128xf32>
    %167 = arith.divf %165, %166 : vector<8x128xf32>
    %168 = vector.extract_strided_slice %161 {offsets = [0, 128], sizes = [8, 128], strides = [1, 1]} : vector<8x512xf32> to vector<8x128xf32>
    %169 = arith.negf %168 : vector<8x128xf32>
    %170 = math.exp %169 : vector<8x128xf32>
    %cst_50 = arith.constant 1.000000e+00 : f32
    %171 = vector.broadcast %cst_50 : f32 to vector<8x128xf32>
    %172 = arith.addf %171, %170 : vector<8x128xf32>
    %173 = arith.divf %171, %172 : vector<8x128xf32>
    %174 = vector.extract_strided_slice %161 {offsets = [0, 256], sizes = [8, 128], strides = [1, 1]} : vector<8x512xf32> to vector<8x128xf32>
    %175 = math.tanh %174 : vector<8x128xf32>
    %176 = vector.extract_strided_slice %161 {offsets = [0, 384], sizes = [8, 128], strides = [1, 1]} : vector<8x512xf32> to vector<8x128xf32>
    %177 = arith.negf %176 : vector<8x128xf32>
    %178 = math.exp %177 : vector<8x128xf32>
    %cst_51 = arith.constant 1.000000e+00 : f32
    %179 = vector.broadcast %cst_51 : f32 to vector<8x128xf32>
    %180 = arith.addf %179, %178 : vector<8x128xf32>
    %181 = arith.divf %179, %180 : vector<8x128xf32>
    %182 = arith.mulf %173, %148 : vector<8x128xf32>
    %183 = arith.mulf %167, %175 : vector<8x128xf32>
    %184 = arith.addf %182, %183 : vector<8x128xf32>
    %185 = math.tanh %184 : vector<8x128xf32>
    %186 = arith.mulf %181, %185 : vector<8x128xf32>
    %187 = vector.broadcast %c4_i32 : i32 to vector<8x1xi32>
    %188 = arith.cmpi eq, %10, %187 : vector<8x1xi32>
    %189 = vector.shape_cast %188 : vector<8x1xi1> to vector<8x1xi1>
    %190 = vector.broadcast %189 : vector<8x1xi1> to vector<8x128xi1>
    %191 = arith.select %190, %186, %155 : vector<8x128xi1>, vector<8x128xf32>
    %c5_i32 = arith.constant 5 : i32
    %192 = arith.index_cast %c5_i32 : i32 to index
    %c0_52 = arith.constant 0 : index
    %c0_53 = arith.constant 0 : index
    %193 = vector.load %arg8[%192, %c0_52, %c0_53] : memref<8x8x512xf32, #tpu.memory_space<vmem>>, vector<1x8x512xf32>
    %194 = vector.shape_cast %193 : vector<1x8x512xf32> to vector<8x512xf32>
    %c0_54 = arith.constant 0 : index
    %c0_55 = arith.constant 0 : index
    %195 = vector.load %arg3[%c0_54, %c0_55] : memref<128x512xf32, #tpu.memory_space<vmem>>, vector<128x512xf32>
    %cst_56 = arith.constant dense<0.000000e+00> : vector<8x512xf32>
    %196 = tpu.matmul %186, %195, %cst_56 {dimension_numbers = #tpu.dot_dimension_numbers<[1], [0], [0], [1], [0, 0, 1, 1], [], []>} : vector<8x128xf32>, vector<128x512xf32>, vector<8x512xf32> -> vector<8x512xf32>
    %197 = arith.addf %194, %196 : vector<8x512xf32>
    %198 = vector.extract_strided_slice %197 {offsets = [0, 0], sizes = [8, 128], strides = [1, 1]} : vector<8x512xf32> to vector<8x128xf32>
    %199 = arith.negf %198 : vector<8x128xf32>
    %200 = math.exp %199 : vector<8x128xf32>
    %cst_57 = arith.constant 1.000000e+00 : f32
    %201 = vector.broadcast %cst_57 : f32 to vector<8x128xf32>
    %202 = arith.addf %201, %200 : vector<8x128xf32>
    %203 = arith.divf %201, %202 : vector<8x128xf32>
    %204 = vector.extract_strided_slice %197 {offsets = [0, 128], sizes = [8, 128], strides = [1, 1]} : vector<8x512xf32> to vector<8x128xf32>
    %205 = arith.negf %204 : vector<8x128xf32>
    %206 = math.exp %205 : vector<8x128xf32>
    %cst_58 = arith.constant 1.000000e+00 : f32
    %207 = vector.broadcast %cst_58 : f32 to vector<8x128xf32>
    %208 = arith.addf %207, %206 : vector<8x128xf32>
    %209 = arith.divf %207, %208 : vector<8x128xf32>
    %210 = vector.extract_strided_slice %197 {offsets = [0, 256], sizes = [8, 128], strides = [1, 1]} : vector<8x512xf32> to vector<8x128xf32>
    %211 = math.tanh %210 : vector<8x128xf32>
    %212 = vector.extract_strided_slice %197 {offsets = [0, 384], sizes = [8, 128], strides = [1, 1]} : vector<8x512xf32> to vector<8x128xf32>
    %213 = arith.negf %212 : vector<8x128xf32>
    %214 = math.exp %213 : vector<8x128xf32>
    %cst_59 = arith.constant 1.000000e+00 : f32
    %215 = vector.broadcast %cst_59 : f32 to vector<8x128xf32>
    %216 = arith.addf %215, %214 : vector<8x128xf32>
    %217 = arith.divf %215, %216 : vector<8x128xf32>
    %218 = arith.mulf %209, %184 : vector<8x128xf32>
    %219 = arith.mulf %203, %211 : vector<8x128xf32>
    %220 = arith.addf %218, %219 : vector<8x128xf32>
    %221 = math.tanh %220 : vector<8x128xf32>
    %222 = arith.mulf %217, %221 : vector<8x128xf32>
    %223 = vector.broadcast %c5_i32 : i32 to vector<8x1xi32>
    %224 = arith.cmpi eq, %10, %223 : vector<8x1xi32>
    %225 = vector.shape_cast %224 : vector<8x1xi1> to vector<8x1xi1>
    %226 = vector.broadcast %225 : vector<8x1xi1> to vector<8x128xi1>
    %227 = arith.select %226, %222, %191 : vector<8x128xi1>, vector<8x128xf32>
    %c6_i32 = arith.constant 6 : i32
    %228 = arith.index_cast %c6_i32 : i32 to index
    %c0_60 = arith.constant 0 : index
    %c0_61 = arith.constant 0 : index
    %229 = vector.load %arg8[%228, %c0_60, %c0_61] : memref<8x8x512xf32, #tpu.memory_space<vmem>>, vector<1x8x512xf32>
    %230 = vector.shape_cast %229 : vector<1x8x512xf32> to vector<8x512xf32>
    %c0_62 = arith.constant 0 : index
    %c0_63 = arith.constant 0 : index
    %231 = vector.load %arg3[%c0_62, %c0_63] : memref<128x512xf32, #tpu.memory_space<vmem>>, vector<128x512xf32>
    %cst_64 = arith.constant dense<0.000000e+00> : vector<8x512xf32>
    %232 = tpu.matmul %222, %231, %cst_64 {dimension_numbers = #tpu.dot_dimension_numbers<[1], [0], [0], [1], [0, 0, 1, 1], [], []>} : vector<8x128xf32>, vector<128x512xf32>, vector<8x512xf32> -> vector<8x512xf32>
    %233 = arith.addf %230, %232 : vector<8x512xf32>
    %234 = vector.extract_strided_slice %233 {offsets = [0, 0], sizes = [8, 128], strides = [1, 1]} : vector<8x512xf32> to vector<8x128xf32>
    %235 = arith.negf %234 : vector<8x128xf32>
    %236 = math.exp %235 : vector<8x128xf32>
    %cst_65 = arith.constant 1.000000e+00 : f32
    %237 = vector.broadcast %cst_65 : f32 to vector<8x128xf32>
    %238 = arith.addf %237, %236 : vector<8x128xf32>
    %239 = arith.divf %237, %238 : vector<8x128xf32>
    %240 = vector.extract_strided_slice %233 {offsets = [0, 128], sizes = [8, 128], strides = [1, 1]} : vector<8x512xf32> to vector<8x128xf32>
    %241 = arith.negf %240 : vector<8x128xf32>
    %242 = math.exp %241 : vector<8x128xf32>
    %cst_66 = arith.constant 1.000000e+00 : f32
    %243 = vector.broadcast %cst_66 : f32 to vector<8x128xf32>
    %244 = arith.addf %243, %242 : vector<8x128xf32>
    %245 = arith.divf %243, %244 : vector<8x128xf32>
    %246 = vector.extract_strided_slice %233 {offsets = [0, 256], sizes = [8, 128], strides = [1, 1]} : vector<8x512xf32> to vector<8x128xf32>
    %247 = math.tanh %246 : vector<8x128xf32>
    %248 = vector.extract_strided_slice %233 {offsets = [0, 384], sizes = [8, 128], strides = [1, 1]} : vector<8x512xf32> to vector<8x128xf32>
    %249 = arith.negf %248 : vector<8x128xf32>
    %250 = math.exp %249 : vector<8x128xf32>
    %cst_67 = arith.constant 1.000000e+00 : f32
    %251 = vector.broadcast %cst_67 : f32 to vector<8x128xf32>
    %252 = arith.addf %251, %250 : vector<8x128xf32>
    %253 = arith.divf %251, %252 : vector<8x128xf32>
    %254 = arith.mulf %245, %220 : vector<8x128xf32>
    %255 = arith.mulf %239, %247 : vector<8x128xf32>
    %256 = arith.addf %254, %255 : vector<8x128xf32>
    %257 = math.tanh %256 : vector<8x128xf32>
    %258 = arith.mulf %253, %257 : vector<8x128xf32>
    %259 = vector.broadcast %c6_i32 : i32 to vector<8x1xi32>
    %260 = arith.cmpi eq, %10, %259 : vector<8x1xi32>
    %261 = vector.shape_cast %260 : vector<8x1xi1> to vector<8x1xi1>
    %262 = vector.broadcast %261 : vector<8x1xi1> to vector<8x128xi1>
    %263 = arith.select %262, %258, %227 : vector<8x128xi1>, vector<8x128xf32>
    %c7_i32 = arith.constant 7 : i32
    %264 = arith.index_cast %c7_i32 : i32 to index
    %c0_68 = arith.constant 0 : index
    %c0_69 = arith.constant 0 : index
    %265 = vector.load %arg8[%264, %c0_68, %c0_69] : memref<8x8x512xf32, #tpu.memory_space<vmem>>, vector<1x8x512xf32>
    %266 = vector.shape_cast %265 : vector<1x8x512xf32> to vector<8x512xf32>
    %c0_70 = arith.constant 0 : index
    %c0_71 = arith.constant 0 : index
    %267 = vector.load %arg3[%c0_70, %c0_71] : memref<128x512xf32, #tpu.memory_space<vmem>>, vector<128x512xf32>
    %cst_72 = arith.constant dense<0.000000e+00> : vector<8x512xf32>
    %268 = tpu.matmul %258, %267, %cst_72 {dimension_numbers = #tpu.dot_dimension_numbers<[1], [0], [0], [1], [0, 0, 1, 1], [], []>} : vector<8x128xf32>, vector<128x512xf32>, vector<8x512xf32> -> vector<8x512xf32>
    %269 = arith.addf %266, %268 : vector<8x512xf32>
    %270 = vector.extract_strided_slice %269 {offsets = [0, 0], sizes = [8, 128], strides = [1, 1]} : vector<8x512xf32> to vector<8x128xf32>
    %271 = arith.negf %270 : vector<8x128xf32>
    %272 = math.exp %271 : vector<8x128xf32>
    %cst_73 = arith.constant 1.000000e+00 : f32
    %273 = vector.broadcast %cst_73 : f32 to vector<8x128xf32>
    %274 = arith.addf %273, %272 : vector<8x128xf32>
    %275 = arith.divf %273, %274 : vector<8x128xf32>
    %276 = vector.extract_strided_slice %269 {offsets = [0, 128], sizes = [8, 128], strides = [1, 1]} : vector<8x512xf32> to vector<8x128xf32>
    %277 = arith.negf %276 : vector<8x128xf32>
    %278 = math.exp %277 : vector<8x128xf32>
    %cst_74 = arith.constant 1.000000e+00 : f32
    %279 = vector.broadcast %cst_74 : f32 to vector<8x128xf32>
    %280 = arith.addf %279, %278 : vector<8x128xf32>
    %281 = arith.divf %279, %280 : vector<8x128xf32>
    %282 = vector.extract_strided_slice %269 {offsets = [0, 256], sizes = [8, 128], strides = [1, 1]} : vector<8x512xf32> to vector<8x128xf32>
    %283 = math.tanh %282 : vector<8x128xf32>
    %284 = vector.extract_strided_slice %269 {offsets = [0, 384], sizes = [8, 128], strides = [1, 1]} : vector<8x512xf32> to vector<8x128xf32>
    %285 = arith.negf %284 : vector<8x128xf32>
    %286 = math.exp %285 : vector<8x128xf32>
    %cst_75 = arith.constant 1.000000e+00 : f32
    %287 = vector.broadcast %cst_75 : f32 to vector<8x128xf32>
    %288 = arith.addf %287, %286 : vector<8x128xf32>
    %289 = arith.divf %287, %288 : vector<8x128xf32>
    %290 = arith.mulf %281, %256 : vector<8x128xf32>
    %291 = arith.mulf %275, %283 : vector<8x128xf32>
    %292 = arith.addf %290, %291 : vector<8x128xf32>
    %293 = math.tanh %292 : vector<8x128xf32>
    %294 = arith.mulf %289, %293 : vector<8x128xf32>
    %295 = vector.broadcast %c7_i32 : i32 to vector<8x1xi32>
    %296 = arith.cmpi eq, %10, %295 : vector<8x1xi32>
    %297 = vector.shape_cast %296 : vector<8x1xi1> to vector<8x1xi1>
    %298 = vector.broadcast %297 : vector<8x1xi1> to vector<8x128xi1>
    %299 = arith.select %298, %294, %263 : vector<8x128xi1>, vector<8x128xf32>
    %c8_i32 = arith.constant 8 : i32
    %c0_76 = arith.constant 0 : index
    %c0_77 = arith.constant 0 : index
    %300 = vector.load %arg5[%c0_76, %c0_77] : memref<128x128xf32, #tpu.memory_space<vmem>>, vector<128x128xf32>
    %cst_78 = arith.constant dense<0.000000e+00> : vector<8x128xf32>
    %301 = tpu.matmul %299, %300, %cst_78 {dimension_numbers = #tpu.dot_dimension_numbers<[1], [0], [0], [1], [0, 0, 1, 1], [], []>} : vector<8x128xf32>, vector<128x128xf32>, vector<8x128xf32> -> vector<8x128xf32>
    %c0_79 = arith.constant 0 : index
    %c0_80 = arith.constant 0 : index
    %302 = vector.load %arg6[%c0_79, %c0_80] : memref<1x128xf32, #tpu.memory_space<vmem>>, vector<1x128xf32>
    %303 = vector.broadcast %302 : vector<1x128xf32> to vector<8x128xf32>
    %304 = arith.addf %301, %303 : vector<8x128xf32>
    %c0_81 = arith.constant 0 : index
    %c0_82 = arith.constant 0 : index
    %305 = vector.load %arg7[%c0_81, %c0_82] : memref<8x128xf32, #tpu.memory_space<vmem>>, vector<8x128xf32>
    tpu.vector_store %arg7[%c0_81, %c0_82], %304 {strides = array<i32>} : memref<8x128xf32, #tpu.memory_space<vmem>>, vector<8x128xf32>,
    return
  }
}

</mosaic_0001>

<llo_original>
// kernel: tpu_custom_call.1
$region0: #{tpu_custom_call.1}
  #allocation0 [shape = 'u32[]', space=smem, size = 0x4, offset = 0x4, fixed_abs, tag = 'smem constant byte address 0x4 - core index']
  #allocation1 [shape = 'u32[144,128]{1,0:T(1,128)}', space=vmem, size = 0x12000, scoped, tag = 'internal scratch']
  #allocation2 [shape = 'f32[8,8,512]{2,1,0:T(8,128)}', space=vmem, size = 0x20000, scoped, tag = 'scratch operand']
  %s0 = inlined_call_operand.vmem [shape: s32[8,1], index: 0, kind: input, shape index: {}]
  %s1 = inlined_call_operand.vmem [shape: f32[64,5], index: 1, kind: input, shape index: {}]
  %s2 = inlined_call_operand.vmem [shape: f32[5,512], index: 2, kind: input, shape index: {}]
  %s3 = inlined_call_operand.hbm [shape: f32[128,512], index: 3, kind: input, shape index: {}]
  %s4 = inlined_call_operand.vmem [shape: f32[1,512], index: 4, kind: input, shape index: {}]
  %s5 = inlined_call_operand.hbm [shape: f32[128,128], index: 5, kind: input, shape index: {}]
  %s6 = inlined_call_operand.vmem [shape: f32[1,128], index: 6, kind: input, shape index: {}]
  %s7 = inlined_call_operand.hbm [shape: f32[8,128], index: 7, kind: output, shape index: {}]
  %s8 = sld [smem:[#allocation0]]
  $region46: #{tpu_custom_call.1} parent=0
    _
  %s10 = ssub.s32 1, %s8
  %s11 = scalar_select 0, %s10, %s8
  $region1: #{tpu_custom_call.1} parent=0
    #allocation3 [shape = 'u8[262144]{0}', space=vmem, size = 0x40000, scoped, tag = 'input window, operand 3, single buffered']
    #allocation4 [shape = 's32[1]{0}', space=sflag, size = 0x4, scoped, tag = 'scoped memory for tpu_custom_call.1']
    #allocation5 [shape = 's32[1]{0}', space=sflag, size = 0x4, scoped, tag = 'scoped memory for tpu_custom_call.1']
    #allocation6 [shape = 'u8[65536]{0}', space=vmem, size = 0x10000, scoped, tag = 'input window, operand 5, single buffered']
    #allocation7 [shape = 's32[1]{0}', space=sflag, size = 0x4, scoped, tag = 'scoped memory for tpu_custom_call.1']
    #allocation8 [shape = 'u8[4096]{0}', space=vmem, size = 0x1000, scoped, tag = 'output window, operand 0, single buffered']
    %12 = vsyncpa [#allocation4], 0
    %13 = vsyncpa [#allocation7], 0
    %14 = vsyncpa [#allocation5], 0
    // Predicated region
    $region2: #{tpu_custom_call.1} parent=1 // pred_check
      _
    $region3: #{tpu_custom_call.1} parent=1 // pred_check_branch
      %16 = sbr.rel (0) target = $region5
    $region4: #{tpu_custom_call.1} parent=1 // pred_region
      _
    $region5: #{tpu_custom_call.1} parent=1 // pred_fallthru
      _
    // Predicated region
    $region6: #{tpu_custom_call.1} parent=1 // pred_check
      _
    $region7: #{tpu_custom_call.1} parent=1 // pred_check_branch
      %18 = sbr.rel (0) target = $region9
    $region8: #{tpu_custom_call.1} parent=1 // pred_region
      _
    $region9: #{tpu_custom_call.1} parent=1 // pred_fallthru
      _
    // Predicated region
    $region10: #{tpu_custom_call.1} parent=1 // pred_check
      _
    $region11: #{tpu_custom_call.1} parent=1 // pred_check_branch
      %20 = sbr.rel (0) target = $region13
    $region12: #{tpu_custom_call.1} parent=1 // pred_region
      _
    $region13: #{tpu_custom_call.1} parent=1 // pred_fallthru
      _
    // Predicated region
    $region14: #{tpu_custom_call.1} parent=1 // pred_check
      _
    $region15: #{tpu_custom_call.1} parent=1 // pred_check_branch
      %22 = sbr.rel (0) target = $region17
    $region16: #{tpu_custom_call.1} parent=1 // pred_region
      %s24 = ssub.s32 8192, 8192
      %25 = vsyncadd [#allocation4], %s24
      %s26 = sshll.u32 [#allocation3], 4
      %s27 = int_to_ptr.vmem [resolvable:$true] %s26
      %32 = dma.hbm_to_vmem [thread:$0]  %s3, 8192, %s27, [#allocation4], 512, 512, 32
    $region17: #{tpu_custom_call.1} parent=1 // pred_fallthru
      _
    // Predicated region
    $region18: #{tpu_custom_call.1} parent=1 // pred_check
      _
    $region19: #{tpu_custom_call.1} parent=1 // pred_check_branch
      %34 = sbr.rel (0) target = $region21
    $region20: #{tpu_custom_call.1} parent=1 // pred_region
      _
    $region21: #{tpu_custom_call.1} parent=1 // pred_fallthru
      _
    // Predicated region
    $region22: #{tpu_custom_call.1} parent=1 // pred_check
      _
    $region23: #{tpu_custom_call.1} parent=1 // pred_check_branch
      %36 = sbr.rel (0) target = $region25
    $region24: #{tpu_custom_call.1} parent=1 // pred_region
      %s38 = ssub.s32 2048, 2048
      %39 = vsyncadd [#allocation7], %s38
      %s40 = sshll.u32 [#allocation6], 4
      %s41 = int_to_ptr.vmem [resolvable:$true] %s40
      %46 = dma.hbm_to_vmem [thread:$0]  %s5, 2048, %s41, [#allocation7], 128, 128, 8
    $region25: #{tpu_custom_call.1} parent=1 // pred_fallthru
      _
    // Predicated region
    $region26: #{tpu_custom_call.1} parent=1 // pred_check
      _
    $region27: #{tpu_custom_call.1} parent=1 // pred_check_branch
      %48 = sbr.rel (0) target = $region29
    $region28: #{tpu_custom_call.1} parent=1 // pred_region
      _
    $region29: #{tpu_custom_call.1} parent=1 // pred_fallthru
      _
    // Predicated region
    $region30: #{tpu_custom_call.1} parent=1 // pred_check
      _
    $region31: #{tpu_custom_call.1} parent=1 // pred_check_branch
      %50 = sbr.rel (0) target = $region33
    $region32: #{tpu_custom_call.1} parent=1 // pred_region
      %51 = dma.done [#allocation4], 8192
    $region33: #{tpu_custom_call.1} parent=1 // pred_fallthru
      _
    // Predicated region
    $region34: #{tpu_custom_call.1} parent=1 // pred_check
      _
    $region35: #{tpu_custom_call.1} parent=1 // pred_check_branch
      %53 = sbr.rel (0) target = $region37
    $region36: #{tpu_custom_call.1} parent=1 // pred_region
      %54 = dma.done [#allocation7], 2048
    $region37: #{tpu_custom_call.1} parent=1 // pred_fallthru
      _
    %v55 = vld [vmem:[%s1] sm:$0xff]
    %v56 = vld [vmem:[%s1 + $0x8] sm:$0xff]
    %v57 = vld [vmem:[%s1 + $0x10] sm:$0xff]
    %v58 = vld [vmem:[%s1 + $0x18] sm:$0xff]
    %v59 = vld [vmem:[%s1 + $0x20] sm:$0xff]
    %v60 = vld [vmem:[%s1 + $0x28] sm:$0xff]
    %v61 = vld [vmem:[%s1 + $0x30] sm:$0xff]
    %v62 = vld [vmem:[%s1 + $0x38] sm:$0xff]
    %v63 = vld [vmem:[%s2] sm:$0x1f]
    %v64 = vld [vmem:[%s2 + $0x8] sm:$0x1f]
    %v65 = vld [vmem:[%s2 + $0x10] sm:$0x1f]
    %v66 = vld [vmem:[%s2 + $0x18] sm:$0x1f]
    %v67 = vld [vmem:[%s4] sm:$0xf]
    %v69 = vlaneseq
    %v70 = vshrl.u32 %v69, 7
    %v71 = vsub.s32 0, %v70
    %v72 = vrot.slane %v67, %v71
    %v73 = vlaneseq
    %v74 = vshrl.u32 %v73, 7
    %v75 = vsub.s32 1, %v74
    %v76 = vrot.slane %v67, %v75
    %v77 = vlaneseq
    %v78 = vshrl.u32 %v77, 7
    %v79 = vsub.s32 2, %v78
    %v80 = vrot.slane %v67, %v79
    %v81 = vlaneseq
    %v82 = vshrl.u32 %v81, 7
    %v83 = vsub.s32 3, %v82
    %v84 = vrot.slane %v67, %v83
    %vm89 = vcmask 39936
    %v91 = vsel %vm89, %v55, 0
    %v94 = vsel %vm89, %v56, 0
    %v97 = vsel %vm89, %v57, 0
    %v100 = vsel %vm89, %v58, 0
    %v103 = vsel %vm89, %v59, 0
    %v106 = vsel %vm89, %v60, 0
    %v109 = vsel %vm89, %v61, 0
    %v112 = vsel %vm89, %v62, 0
    %vm114 = vcmask 1044480
    %v116 = vsel %vm114, %v63, 0
    %v119 = vsel %vm114, %v64, 0
    %v122 = vsel %vm114, %v65, 0
    %v125 = vsel %vm114, %v66, 0
    %127 = vmatprep.subr.mxu0 %v119
    %128 = vmatpush1.msra.mxu0 %v116
    %129 = vmatprep.subr.mxu0 0.0
    %130 = vmatpush1.msra.mxu0 0.0
    %131 = vmatprep.subr.mxu0 0.0
    %132 = vmatpush1.msra.mxu0 0.0
    %133 = vmatprep.subr.mxu0 0.0
    %134 = vmatpush1.msra.mxu0 0.0
    %135 = vmatprep.subr.mxu0 0.0
    %136 = vmatpush1.msra.mxu0 0.0
    %137 = vmatprep.subr.mxu0 0.0
    %138 = vmatpush1.msra.mxu0 0.0
    %139 = vmatprep.subr.mxu0 0.0
    %140 = vmatpush1.msra.mxu0 0.0
    %141 = vmatprep.subr.mxu0 0.0
    %142 = vmatpush1.msra.mxu0 0.0
    %143 = vmatprep.subr.mxu0 0.0
    %144 = vmatpush1.msra.mxu0 0.0
    %145 = vmatprep.subr.mxu0 0.0
    %146 = vmatpush1.msra.mxu0 0.0
    %147 = vmatprep.subr.mxu0 0.0
    %148 = vmatpush1.msra.mxu0 0.0
    %149 = vmatprep.subr.mxu0 0.0
    %150 = vmatpush1.msra.mxu0 0.0
    %151 = vmatprep.subr.mxu0 0.0
    %152 = vmatpush1.msra.mxu0 0.0
    %153 = vmatprep.subr.mxu0 0.0
    %154 = vmatpush1.msra.mxu0 0.0
    %155 = vmatprep.subr.mxu0 0.0
    %156 = vmatpush1.msra.mxu0 0.0
    %157 = vmatprep.subr.mxu0 0.0
    %158 = vmatpush1.msra.mxu0 0.0
    %159 = vmatprep.subr.mxu0 0.0
    %160 = vmatpush1.msra.mxu0 0.0
    %161 = vmatprep.subr.mxu0 0.0
    %162 = vmatpush1.msra.mxu0 0.0
    %163 = vmatprep.subr.mxu0 0.0
    %164 = vmatpush1.msra.mxu0 0.0
    %165 = vmatprep.subr.mxu0 0.0
    %166 = vmatpush1.msra.mxu0 0.0
    %167 = vmatprep.subr.mxu0 0.0
    %168 = vmatpush1.msra.mxu0 0.0
    %169 = vmatprep.subr.mxu0 0.0
    %170 = vmatpush1.msra.mxu0 0.0
    %171 = vmatprep.subr.mxu0 0.0
    %172 = vmatpush1.msra.mxu0 0.0
    %173 = vmatprep.subr.mxu0 0.0
    %174 = vmatpush1.msra.mxu0 0.0
    %175 = vmatprep.subr.mxu0 0.0
    %176 = vmatpush1.msra.mxu0 0.0
    %177 = vmatprep.subr.mxu0 0.0
    %178 = vmatpush1.msra.mxu0 0.0
    %179 = vmatprep.subr.mxu0 0.0
    %180 = vmatpush1.msra.mxu0 0.0
    %181 = vmatprep.subr.mxu0 0.0
    %182 = vmatpush1.msra.mxu0 0.0
    %183 = vmatprep.subr.mxu0 0.0
    %184 = vmatpush1.msra.mxu0 0.0
    %185 = vmatprep.subr.mxu0 0.0
    %186 = vmatpush1.msra.mxu0 0.0
    %187 = vmatprep.subr.mxu0 0.0
    %188 = vmatpush1.msra.mxu0 0.0
    %189 = vmatprep.subr.mxu0 0.0
    %190 = vmatpush1.msra.mxu0 0.0
    %191 = vmatprep.mubr.f32.mxu0 0.0
    %192 = vmatmul.mubr.f32.gmra.mrb[0].mxu0 %v91
    %v193 = vpop.f32.mrb[0].mxu0
    %v194 = vadd.f32 %v72, %v193
    %v195 = vpop.f32.mrb[0].mxu0
    %v196 = vadd.f32 %v76, %v195
    %197 = vmatprep.mubr.f32.mxu0 0.0
    %198 = vmatmul.mubr.f32.gmra.mrb[0].mxu0 %v94
    %v199 = vpop.f32.mrb[0].mxu0
    %v200 = vadd.f32 %v72, %v199
    %v201 = vpop.f32.mrb[0].mxu0
    %v202 = vadd.f32 %v76, %v201
    %203 = vmatprep.mubr.f32.mxu0 0.0
    %204 = vmatmul.mubr.f32.gmra.mrb[0].mxu0 %v97
    %v205 = vpop.f32.mrb[0].mxu0
    %v206 = vadd.f32 %v72, %v205
    %v207 = vpop.f32.mrb[0].mxu0
    %v208 = vadd.f32 %v76, %v207
    %209 = vmatprep.mubr.f32.mxu0 0.0
    %210 = vmatmul.mubr.f32.gmra.mrb[0].mxu0 %v100
    %v211 = vpop.f32.mrb[0].mxu0
    %v212 = vadd.f32 %v72, %v211
    %v213 = vpop.f32.mrb[0].mxu0
    %v214 = vadd.f32 %v76, %v213
    %215 = vmatprep.mubr.f32.mxu0 0.0
    %216 = vmatmul.mubr.f32.gmra.mrb[0].mxu0 %v103
    %v217 = vpop.f32.mrb[0].mxu0
    %v218 = vadd.f32 %v72, %v217
    %v219 = vpop.f32.mrb[0].mxu0
    %v220 = vadd.f32 %v76, %v219
    %221 = vmatprep.mubr.f32.mxu0 0.0
    %222 = vmatmul.mubr.f32.gmra.mrb[0].mxu0 %v106
    %v223 = vpop.f32.mrb[0].mxu0
    %v224 = vadd.f32 %v72, %v223
    %v225 = vpop.f32.mrb[0].mxu0
    %v226 = vadd.f32 %v76, %v225
    %227 = vmatprep.mubr.f32.mxu0 0.0
    %228 = vmatmul.mubr.f32.gmra.mrb[0].mxu0 %v109
    %v229 = vpop.f32.mrb[0].mxu0
    %v230 = vadd.f32 %v72, %v229
    %v231 = vpop.f32.mrb[0].mxu0
    %v232 = vadd.f32 %v76, %v231
    %233 = vmatprep.mubr.f32.mxu0 0.0
    %234 = vmatmul.mubr.f32.gmra.mrb[0].mxu0 %v112
    %v235 = vpop.f32.mrb[0].mxu0
    %v236 = vadd.f32 %v72, %v235
    %v237 = vpop.f32.mrb[0].mxu0
    %v238 = vadd.f32 %v76, %v237
    %239 = vdwg.mxu0
    %240 = vmatprep.subr.mxu0 %v125
    %241 = vmatpush1.msra.mxu0 %v122
    %242 = vmatprep.subr.mxu0 0.0
    %243 = vmatpush1.msra.mxu0 0.0
    %244 = vmatprep.subr.mxu0 0.0
    %245 = vmatpush1.msra.mxu0 0.0
    %246 = vmatprep.subr.mxu0 0.0
    %247 = vmatpush1.msra.mxu0 0.0
    %248 = vmatprep.subr.mxu0 0.0
    %249 = vmatpush1.msra.mxu0 0.0
    %250 = vmatprep.subr.mxu0 0.0
    %251 = vmatpush1.msra.mxu0 0.0
    %252 = vmatprep.subr.mxu0 0.0
    %253 = vmatpush1.msra.mxu0 0.0
    %254 = vmatprep.subr.mxu0 0.0
    %255 = vmatpush1.msra.mxu0 0.0
    %256 = vmatprep.subr.mxu0 0.0
    %257 = vmatpush1.msra.mxu0 0.0
    %258 = vmatprep.subr.mxu0 0.0
    %259 = vmatpush1.msra.mxu0 0.0
    %260 = vmatprep.subr.mxu0 0.0
    %261 = vmatpush1.msra.mxu0 0.0
    %262 = vmatprep.subr.mxu0 0.0
    %263 = vmatpush1.msra.mxu0 0.0
    %264 = vmatprep.subr.mxu0 0.0
    %265 = vmatpush1.msra.mxu0 0.0
    %266 = vmatprep.subr.mxu0 0.0
    %267 = vmatpush1.msra.mxu0 0.0
    %268 = vmatprep.subr.mxu0 0.0
    %269 = vmatpush1.msra.mxu0 0.0
    %270 = vmatprep.subr.mxu0 0.0
    %271 = vmatpush1.msra.mxu0 0.0
    %272 = vmatprep.subr.mxu0 0.0
    %273 = vmatpush1.msra.mxu0 0.0
    %274 = vmatprep.subr.mxu0 0.0
    %275 = vmatpush1.msra.mxu0 0.0
    %276 = vmatprep.subr.mxu0 0.0
    %277 = vmatpush1.msra.mxu0 0.0
    %278 = vmatprep.subr.mxu0 0.0
    %279 = vmatpush1.msra.mxu0 0.0
    %280 = vmatprep.subr.mxu0 0.0
    %281 = vmatpush1.msra.mxu0 0.0
    %282 = vmatprep.subr.mxu0 0.0
    %283 = vmatpush1.msra.mxu0 0.0
    %284 = vmatprep.subr.mxu0 0.0
    %285 = vmatpush1.msra.mxu0 0.0
    %286 = vmatprep.subr.mxu0 0.0
    %287 = vmatpush1.msra.mxu0 0.0
    %288 = vmatprep.subr.mxu0 0.0
    %289 = vmatpush1.msra.mxu0 0.0
    %290 = vmatprep.subr.mxu0 0.0
    %291 = vmatpush1.msra.mxu0 0.0
    %292 = vmatprep.subr.mxu0 0.0
    %293 = vmatpush1.msra.mxu0 0.0
    %294 = vmatprep.subr.mxu0 0.0
    %295 = vmatpush1.msra.mxu0 0.0
    %296 = vmatprep.subr.mxu0 0.0
    %297 = vmatpush1.msra.mxu0 0.0
    %298 = vmatprep.subr.mxu0 0.0
    %299 = vmatpush1.msra.mxu0 0.0
    %300 = vmatprep.subr.mxu0 0.0
    %301 = vmatpush1.msra.mxu0 0.0
    %302 = vmatprep.subr.mxu0 0.0
    %303 = vmatpush1.msra.mxu0 0.0
    %304 = vmatprep.mubr.f32.mxu0 0.0
    %305 = vmatmul.mubr.f32.gmra.mrb[0].mxu0 %v91
    %v306 = vpop.f32.mrb[0].mxu0
    %v307 = vadd.f32 %v80, %v306
    %v308 = vpop.f32.mrb[0].mxu0
    %v309 = vadd.f32 %v84, %v308
    %310 = vmatprep.mubr.f32.mxu0 0.0
    %311 = vmatmul.mubr.f32.gmra.mrb[0].mxu0 %v94
    %v312 = vpop.f32.mrb[0].mxu0
    %v313 = vadd.f32 %v80, %v312
    %v314 = vpop.f32.mrb[0].mxu0
    %v315 = vadd.f32 %v84, %v314
    %316 = vmatprep.mubr.f32.mxu0 0.0
    %317 = vmatmul.mubr.f32.gmra.mrb[0].mxu0 %v97
    %v318 = vpop.f32.mrb[0].mxu0
    %v319 = vadd.f32 %v80, %v318
    %v320 = vpop.f32.mrb[0].mxu0
    %v321 = vadd.f32 %v84, %v320
    %322 = vmatprep.mubr.f32.mxu0 0.0
    %323 = vmatmul.mubr.f32.gmra.mrb[0].mxu0 %v100
    %v324 = vpop.f32.mrb[0].mxu0
    %v325 = vadd.f32 %v80, %v324
    %v326 = vpop.f32.mrb[0].mxu0
    %v327 = vadd.f32 %v84, %v326
    %328 = vmatprep.mubr.f32.mxu0 0.0
    %329 = vmatmul.mubr.f32.gmra.mrb[0].mxu0 %v103
    %v330 = vpop.f32.mrb[0].mxu0
    %v331 = vadd.f32 %v80, %v330
    %v332 = vpop.f32.mrb[0].mxu0
    %v333 = vadd.f32 %v84, %v332
    %334 = vmatprep.mubr.f32.mxu0 0.0
    %335 = vmatmul.mubr.f32.gmra.mrb[0].mxu0 %v106
    %v336 = vpop.f32.mrb[0].mxu0
    %v337 = vadd.f32 %v80, %v336
    %v338 = vpop.f32.mrb[0].mxu0
    %v339 = vadd.f32 %v84, %v338
    %340 = vmatprep.mubr.f32.mxu0 0.0
    %341 = vmatmul.mubr.f32.gmra.mrb[0].mxu0 %v109
    %v342 = vpop.f32.mrb[0].mxu0
    %v343 = vadd.f32 %v80, %v342
    %v344 = vpop.f32.mrb[0].mxu0
    %v345 = vadd.f32 %v84, %v344
    %346 = vmatprep.mubr.f32.mxu0 0.0
    %347 = vmatmul.mubr.f32.gmra.mrb[0].mxu0 %v112
    %v348 = vpop.f32.mrb[0].mxu0
    %v349 = vadd.f32 %v80, %v348
    %v350 = vpop.f32.mrb[0].mxu0
    %v351 = vadd.f32 %v84, %v350
    %352 = vdwg.mxu0
    %353 = vst [vmem:[#allocation2] sm:$0xff] %v194
    %354 = vst [vmem:[#allocation2 + $0x8] sm:$0xff] %v196
    %355 = vst [vmem:[#allocation2 + $0x10] sm:$0xff] %v307
    %356 = vst [vmem:[#allocation2 + $0x18] sm:$0xff] %v309
    %357 = vst [vmem:[#allocation2 + $0x20] sm:$0xff] %v200
    %358 = vst [vmem:[#allocation2 + $0x28] sm:$0xff] %v202
    %359 = vst [vmem:[#allocation2 + $0x30] sm:$0xff] %v313
    %360 = vst [vmem:[#allocation2 + $0x38] sm:$0xff] %v315
    %361 = vst [vmem:[#allocation2 + $0x40] sm:$0xff] %v206
    %362 = vst [vmem:[#allocation2 + $0x48] sm:$0xff] %v208
    %363 = vst [vmem:[#allocation2 + $0x50] sm:$0xff] %v319
    %364 = vst [vmem:[#allocation2 + $0x58] sm:$0xff] %v321
    %365 = vst [vmem:[#allocation2 + $0x60] sm:$0xff] %v212
    %366 = vst [vmem:[#allocation2 + $0x68] sm:$0xff] %v214
    %367 = vst [vmem:[#allocation2 + $0x70] sm:$0xff] %v325
    %368 = vst [vmem:[#allocation2 + $0x78] sm:$0xff] %v327
    %369 = vst [vmem:[#allocation2 + $0x80] sm:$0xff] %v218
    %370 = vst [vmem:[#allocation2 + $0x88] sm:$0xff] %v220
    %371 = vst [vmem:[#allocation2 + $0x90] sm:$0xff] %v331
    %372 = vst [vmem:[#allocation2 + $0x98] sm:$0xff] %v333
    %373 = vst [vmem:[#allocation2 + $0xa0] sm:$0xff] %v224
    %374 = vst [vmem:[#allocation2 + $0xa8] sm:$0xff] %v226
    %375 = vst [vmem:[#allocation2 + $0xb0] sm:$0xff] %v337
    %376 = vst [vmem:[#allocation2 + $0xb8] sm:$0xff] %v339
    %377 = vst [vmem:[#allocation2 + $0xc0] sm:$0xff] %v230
    %378 = vst [vmem:[#allocation2 + $0xc8] sm:$0xff] %v232
    %379 = vst [vmem:[#allocation2 + $0xd0] sm:$0xff] %v343
    %380 = vst [vmem:[#allocation2 + $0xd8] sm:$0xff] %v345
    %381 = vst [vmem:[#allocation2 + $0xe0] sm:$0xff] %v236
    %382 = vst [vmem:[#allocation2 + $0xe8] sm:$0xff] %v238
    %383 = vst [vmem:[#allocation2 + $0xf0] sm:$0xff] %v349
    %384 = vst [vmem:[#allocation2 + $0xf8] sm:$0xff] %v351
    %v385 = vld [vmem:[%s0] sm:$0xff]
    %v386 = vsub.s32 %v385, 1
    %v387 = vld [vmem:[#allocation2] sm:$0xff]
    %v388 = vld [vmem:[#allocation2 + $0x8] sm:$0xff]
    %v389 = vld [vmem:[#allocation2 + $0x10] sm:$0xff]
    %v390 = vld [vmem:[#allocation2 + $0x18] sm:$0xff]
    %v391 = vld [vmem:[#allocation3] sm:$0xff]
    %v392 = vld [vmem:[#allocation3 + $0x8] sm:$0xff]
    %v393 = vld [vmem:[#allocation3 + $0x10] sm:$0xff]
    %v394 = vld [vmem:[#allocation3 + $0x18] sm:$0xff]
    %v395 = vld [vmem:[#allocation3 + $0x20] sm:$0xff]
    %v396 = vld [vmem:[#allocation3 + $0x28] sm:$0xff]
    %v397 = vld [vmem:[#allocation3 + $0x30] sm:$0xff]
    %v398 = vld [vmem:[#allocation3 + $0x38] sm:$0xff]
    %v399 = vld [vmem:[#allocation3 + $0x40] sm:$0xff]
    %v400 = vld [vmem:[#allocation3 + $0x48] sm:$0xff]
    %v401 = vld [vmem:[#allocation3 + $0x50] sm:$0xff]
    %v402 = vld [vmem:[#allocation3 + $0x58] sm:$0xff]
    %v403 = vld [vmem:[#allocation3 + $0x60] sm:$0xff]
    %v404 = vld [vmem:[#allocation3 + $0x68] sm:$0xff]
    %v405 = vld [vmem:[#allocation3 + $0x70] sm:$0xff]
    %v406 = vld [vmem:[#allocation3 + $0x78] sm:$0xff]
    %v407 = vld [vmem:[#allocation3 + $0x80] sm:$0xff]
    %v408 = vld [vmem:[#allocation3 + $0x88] sm:$0xff]
    %v409 = vld [vmem:[#allocation3 + $0x90] sm:$0xff]
    %v410 = vld [vmem:[#allocation3 + $0x98] sm:$0xff]
    %v411 = vld [vmem:[#allocation3 + $0xa0] sm:$0xff]
    %v412 = vld [vmem:[#allocation3 + $0xa8] sm:$0xff]
    %v413 = vld [vmem:[#allocation3 + $0xb0] sm:$0xff]
    %v414 = vld [vmem:[#allocation3 + $0xb8] sm:$0xff]
    %v415 = vld [vmem:[#allocation3 + $0xc0] sm:$0xff]
    %v416 = vld [vmem:[#allocation3 + $0xc8] sm:$0xff]
    %v417 = vld [vmem:[#allocation3 + $0xd0] sm:$0xff]
    %v418 = vld [vmem:[#allocation3 + $0xd8] sm:$0xff]
    %v419 = vld [vmem:[#allocation3 + $0xe0] sm:$0xff]
    %v420 = vld [vmem:[#allocation3 + $0xe8] sm:$0xff]
    %v421 = vld [vmem:[#allocation3 + $0xf0] sm:$0xff]
    %v422 = vld [vmem:[#allocation3 + $0xf8] sm:$0xff]
    %v423 = vld [vmem:[#allocation3 + $0x100] sm:$0xff]
    %v424 = vld [vmem:[#allocation3 + $0x108] sm:$0xff]
    %v425 = vld [vmem:[#allocation3 + $0x110] sm:$0xff]
    %v426 = vld [vmem:[#allocation3 + $0x118] sm:$0xff]
    %v427 = vld [vmem:[#allocation3 + $0x120] sm:$0xff]
    %v428 = vld [vmem:[#allocation3 + $0x128] sm:$0xff]
    %v429 = vld [vmem:[#allocation3 + $0x130] sm:$0xff]
    %v430 = vld [vmem:[#allocation3 + $0x138] sm:$0xff]
    %v431 = vld [vmem:[#allocation3 + $0x140] sm:$0xff]
    %v432 = vld [vmem:[#allocation3 + $0x148] sm:$0xff]
    %v433 = vld [vmem:[#allocation3 + $0x150] sm:$0xff]
    %v434 = vld [vmem:[#allocation3 + $0x158] sm:$0xff]
    %v435 = vld [vmem:[#allocation3 + $0x160] sm:$0xff]
    %v436 = vld [vmem:[#allocation3 + $0x168] sm:$0xff]
    %v437 = vld [vmem:[#allocation3 + $0x170] sm:$0xff]
    %v438 = vld [vmem:[#allocation3 + $0x178] sm:$0xff]
    %v439 = vld [vmem:[#allocation3 + $0x180] sm:$0xff]
    %v440 = vld [vmem:[#allocation3 + $0x188] sm:$0xff]
    %v441 = vld [vmem:[#allocation3 + $0x190] sm:$0xff]
    %v442 = vld [vmem:[#allocation3 + $0x198] sm:$0xff]
    %v443 = vld [vmem:[#allocation3 + $0x1a0] sm:$0xff]
    %v444 = vld [vmem:[#allocation3 + $0x1a8] sm:$0xff]
    %v445 = vld [vmem:[#allocation3 + $0x1b0] sm:$0xff]
    %v446 = vld [vmem:[#allocation3 + $0x1b8] sm:$0xff]
    %v447 = vld [vmem:[#allocation3 + $0x1c0] sm:$0xff]
    %v448 = vld [vmem:[#allocation3 + $0x1c8] sm:$0xff]
    %v449 = vld [vmem:[#allocation3 + $0x1d0] sm:$0xff]
    %v450 = vld [vmem:[#allocation3 + $0x1d8] sm:$0xff]
    %v451 = vld [vmem:[#allocation3 + $0x1e0] sm:$0xff]
    %v452 = vld [vmem:[#allocation3 + $0x1e8] sm:$0xff]
    %v453 = vld [vmem:[#allocation3 + $0x1f0] sm:$0xff]
    %v454 = vld [vmem:[#allocation3 + $0x1f8] sm:$0xff]
    %455 = vmatprep.subr.mxu0 %v392
    %456 = vmatpush1.msra.mxu0 %v391
    %457 = vmatprep.subr.mxu0 %v396
    %458 = vmatpush1.msra.mxu0 %v395
    %459 = vmatprep.subr.mxu0 %v400
    %460 = vmatpush1.msra.mxu0 %v399
    %461 = vmatprep.subr.mxu0 %v404
    %462 = vmatpush1.msra.mxu0 %v403
    %463 = vmatprep.subr.mxu0 %v408
    %464 = vmatpush1.msra.mxu0 %v407
    %465 = vmatprep.subr.mxu0 %v412
    %466 = vmatpush1.msra.mxu0 %v411
    %467 = vmatprep.subr.mxu0 %v416
    %468 = vmatpush1.msra.mxu0 %v415
    %469 = vmatprep.subr.mxu0 %v420
    %470 = vmatpush1.msra.mxu0 %v419
    %471 = vmatprep.subr.mxu0 %v424
    %472 = vmatpush1.msra.mxu0 %v423
    %473 = vmatprep.subr.mxu0 %v428
    %474 = vmatpush1.msra.mxu0 %v427
    %475 = vmatprep.subr.mxu0 %v432
    %476 = vmatpush1.msra.mxu0 %v431
    %477 = vmatprep.subr.mxu0 %v436
    %478 = vmatpush1.msra.mxu0 %v435
    %479 = vmatprep.subr.mxu0 %v440
    %480 = vmatpush1.msra.mxu0 %v439
    %481 = vmatprep.subr.mxu0 %v444
    %482 = vmatpush1.msra.mxu0 %v443
    %483 = vmatprep.subr.mxu0 %v448
    %484 = vmatpush1.msra.mxu0 %v447
    %485 = vmatprep.subr.mxu0 %v452
    %486 = vmatpush1.msra.mxu0 %v451
    %487 = vmatprep.subr.mxu0 0.0
    %488 = vmatpush1.msra.mxu0 0.0
    %489 = vmatprep.subr.mxu0 0.0
    %490 = vmatpush1.msra.mxu0 0.0
    %491 = vmatprep.subr.mxu0 0.0
    %492 = vmatpush1.msra.mxu0 0.0
    %493 = vmatprep.subr.mxu0 0.0
    %494 = vmatpush1.msra.mxu0 0.0
    %495 = vmatprep.subr.mxu0 0.0
    %496 = vmatpush1.msra.mxu0 0.0
    %497 = vmatprep.subr.mxu0 0.0
    %498 = vmatpush1.msra.mxu0 0.0
    %499 = vmatprep.subr.mxu0 0.0
    %500 = vmatpush1.msra.mxu0 0.0
    %501 = vmatprep.subr.mxu0 0.0
    %502 = vmatpush1.msra.mxu0 0.0
    %503 = vmatprep.subr.mxu0 0.0
    %504 = vmatpush1.msra.mxu0 0.0
    %505 = vmatprep.subr.mxu0 0.0
    %506 = vmatpush1.msra.mxu0 0.0
    %507 = vmatprep.subr.mxu0 0.0
    %508 = vmatpush1.msra.mxu0 0.0
    %509 = vmatprep.subr.mxu0 0.0
    %510 = vmatpush1.msra.mxu0 0.0
    %511 = vmatprep.subr.mxu0 0.0
    %512 = vmatpush1.msra.mxu0 0.0
    %513 = vmatprep.subr.mxu0 0.0
    %514 = vmatpush1.msra.mxu0 0.0
    %515 = vmatprep.subr.mxu0 0.0
    %516 = vmatpush1.msra.mxu0 0.0
    %517 = vmatprep.subr.mxu0 0.0
    %518 = vmatpush1.msra.mxu0 0.0
    %519 = vmatprep.mubr.f32.mxu0 0.0
    %520 = vmatmul.mubr.f32.gmra.mrb[0].mxu0 0.0
    %v521 = vpop.f32.mrb[0].mxu0
    %v522 = vadd.f32 0.0, %v521
    %v523 = vpop.f32.mrb[0].mxu0
    %v524 = vadd.f32 0.0, %v523
    %525 = vdwg.mxu0
    %526 = vmatprep.subr.mxu0 %v394
    %527 = vmatpush1.msra.mxu0 %v393
    %528 = vmatprep.subr.mxu0 %v398
    %529 = vmatpush1.msra.mxu0 %v397
    %530 = vmatprep.subr.mxu0 %v402
    %531 = vmatpush1.msra.mxu0 %v401
    %532 = vmatprep.subr.mxu0 %v406
    %533 = vmatpush1.msra.mxu0 %v405
    %534 = vmatprep.subr.mxu0 %v410
    %535 = vmatpush1.msra.mxu0 %v409
    %536 = vmatprep.subr.mxu0 %v414
    %537 = vmatpush1.msra.mxu0 %v413
    %538 = vmatprep.subr.mxu0 %v418
    %539 = vmatpush1.msra.mxu0 %v417
    %540 = vmatprep.subr.mxu0 %v422
    %541 = vmatpush1.msra.mxu0 %v421
    %542 = vmatprep.subr.mxu0 %v426
    %543 = vmatpush1.msra.mxu0 %v425
    %544 = vmatprep.subr.mxu0 %v430
    %545 = vmatpush1.msra.mxu0 %v429
    %546 = vmatprep.subr.mxu0 %v434
    %547 = vmatpush1.msra.mxu0 %v433
    %548 = vmatprep.subr.mxu0 %v438
    %549 = vmatpush1.msra.mxu0 %v437
    %550 = vmatprep.subr.mxu0 %v442
    %551 = vmatpush1.msra.mxu0 %v441
    %552 = vmatprep.subr.mxu0 %v446
    %553 = vmatpush1.msra.mxu0 %v445
    %554 = vmatprep.subr.mxu0 %v450
    %555 = vmatpush1.msra.mxu0 %v449
    %556 = vmatprep.subr.mxu0 %v454
    %557 = vmatpush1.msra.mxu0 %v453
    %558 = vmatprep.subr.mxu0 0.0
    %559 = vmatpush1.msra.mxu0 0.0
    %560 = vmatprep.subr.mxu0 0.0
    %561 = vmatpush1.msra.mxu0 0.0
    %562 = vmatprep.subr.mxu0 0.0
    %563 = vmatpush1.msra.mxu0 0.0
    %564 = vmatprep.subr.mxu0 0.0
    %565 = vmatpush1.msra.mxu0 0.0
    %566 = vmatprep.subr.mxu0 0.0
    %567 = vmatpush1.msra.mxu0 0.0
    %568 = vmatprep.subr.mxu0 0.0
    %569 = vmatpush1.msra.mxu0 0.0
    %570 = vmatprep.subr.mxu0 0.0
    %571 = vmatpush1.msra.mxu0 0.0
    %572 = vmatprep.subr.mxu0 0.0
    %573 = vmatpush1.msra.mxu0 0.0
    %574 = vmatprep.subr.mxu0 0.0
    %575 = vmatpush1.msra.mxu0 0.0
    %576 = vmatprep.subr.mxu0 0.0
    %577 = vmatpush1.msra.mxu0 0.0
    %578 = vmatprep.subr.mxu0 0.0
    %579 = vmatpush1.msra.mxu0 0.0
    %580 = vmatprep.subr.mxu0 0.0
    %581 = vmatpush1.msra.mxu0 0.0
    %582 = vmatprep.subr.mxu0 0.0
    %583 = vmatpush1.msra.mxu0 0.0
    %584 = vmatprep.subr.mxu0 0.0
    %585 = vmatpush1.msra.mxu0 0.0
    %586 = vmatprep.subr.mxu0 0.0
    %587 = vmatpush1.msra.mxu0 0.0
    %588 = vmatprep.subr.mxu0 0.0
    %589 = vmatpush1.msra.mxu0 0.0
    %590 = vmatprep.mubr.f32.mxu0 0.0
    %591 = vmatmul.mubr.f32.gmra.mrb[0].mxu0 0.0
    %v592 = vpop.f32.mrb[0].mxu0
    %v593 = vadd.f32 0.0, %v592
    %v594 = vpop.f32.mrb[0].mxu0
    %v595 = vadd.f32 0.0, %v594
    %596 = vdwg.mxu0
    %v597 = vadd.f32 %v387, %v522
    %v598 = vadd.f32 %v388, %v524
    %v599 = vadd.f32 %v389, %v593
    %v600 = vadd.f32 %v390, %v595
    %v601 = vxor.u32 %v597, 2147483648
    %v602 = vmul.f32 %v601, 1.442695
    %v603 = vpow.pop %v602
    %v604 = vadd.f32 %v603, 1.0
    %v605 = vrcp.pop %v604
    %v606 = vmul.f32 1.0, %v605
    %v607 = vxor.u32 %v598, 2147483648
    %v608 = vmul.f32 %v607, 1.442695
    %v609 = vpow.pop %v608
    %v610 = vadd.f32 %v609, 1.0
    %v611 = vrcp.pop %v610
    %v612 = vmul.f32 1.0, %v611
    %v613 = vtanh.pop %v599
    %v614 = vxor.u32 %v600, 2147483648
    %v615 = vmul.f32 %v614, 1.442695
    %v616 = vpow.pop %v615
    %v617 = vadd.f32 %v616, 1.0
    %v618 = vrcp.pop %v617
    %v619 = vmul.f32 1.0, %v618
    %v620 = vmul.f32 %v612, 0.0
    %v621 = vmul.f32 %v606, %v613
    %v622 = vadd.f32 %v620, %v621
    %v623 = vtanh.pop %v622
    %v624 = vmul.f32 %v619, %v623
    %vm625 = vcmp.eq.s32.totalorder %v386, 0
    %v626 = vsel %vm625, 1, 0
    %627 = vset.pattern.permute.xlu0 0
    %628 = vperm.xlu0 %627, %v626
    %v629 = vpop.permute.xlu0 %628
    %vm630 = vcmp.eq.s32.totalorder %v629, 1
    %v631 = vsel %vm630, %v624, 0.0
    %s632 = scalar_lea.vmem [#allocation2], 32
    %v633 = vld [vmem:[%s632] sm:$0xff]
    %v634 = vld [vmem:[%s632 + $0x8] sm:$0xff]
    %v635 = vld [vmem:[%s632 + $0x10] sm:$0xff]
    %v636 = vld [vmem:[%s632 + $0x18] sm:$0xff]
    %637 = vmatprep.subr.mxu0 %v392
    %638 = vmatpush1.msra.mxu0 %v391
    %639 = vmatprep.subr.mxu0 %v396
    %640 = vmatpush1.msra.mxu0 %v395
    %641 = vmatprep.subr.mxu0 %v400
    %642 = vmatpush1.msra.mxu0 %v399
    %643 = vmatprep.subr.mxu0 %v404
    %644 = vmatpush1.msra.mxu0 %v403
    %645 = vmatprep.subr.mxu0 %v408
    %646 = vmatpush1.msra.mxu0 %v407
    %647 = vmatprep.subr.mxu0 %v412
    %648 = vmatpush1.msra.mxu0 %v411
    %649 = vmatprep.subr.mxu0 %v416
    %650 = vmatpush1.msra.mxu0 %v415
    %651 = vmatprep.subr.mxu0 %v420
    %652 = vmatpush1.msra.mxu0 %v419
    %653 = vmatprep.subr.mxu0 %v424
    %654 = vmatpush1.msra.mxu0 %v423
    %655 = vmatprep.subr.mxu0 %v428
    %656 = vmatpush1.msra.mxu0 %v427
    %657 = vmatprep.subr.mxu0 %v432
    %658 = vmatpush1.msra.mxu0 %v431
    %659 = vmatprep.subr.mxu0 %v436
    %660 = vmatpush1.msra.mxu0 %v435
    %661 = vmatprep.subr.mxu0 %v440
    %662 = vmatpush1.msra.mxu0 %v439
    %663 = vmatprep.subr.mxu0 %v444
    %664 = vmatpush1.msra.mxu0 %v443
    %665 = vmatprep.subr.mxu0 %v448
    %666 = vmatpush1.msra.mxu0 %v447
    %667 = vmatprep.subr.mxu0 %v452
    %668 = vmatpush1.msra.mxu0 %v451
    %669 = vmatprep.subr.mxu0 0.0
    %670 = vmatpush1.msra.mxu0 0.0
    %671 = vmatprep.subr.mxu0 0.0
    %672 = vmatpush1.msra.mxu0 0.0
    %673 = vmatprep.subr.mxu0 0.0
    %674 = vmatpush1.msra.mxu0 0.0
    %675 = vmatprep.subr.mxu0 0.0
    %676 = vmatpush1.msra.mxu0 0.0
    %677 = vmatprep.subr.mxu0 0.0
    %678 = vmatpush1.msra.mxu0 0.0
    %679 = vmatprep.subr.mxu0 0.0
    %680 = vmatpush1.msra.mxu0 0.0
    %681 = vmatprep.subr.mxu0 0.0
    %682 = vmatpush1.msra.mxu0 0.0
    %683 = vmatprep.subr.mxu0 0.0
    %684 = vmatpush1.msra.mxu0 0.0
    %685 = vmatprep.subr.mxu0 0.0
    %686 = vmatpush1.msra.mxu0 0.0
    %687 = vmatprep.subr.mxu0 0.0
    %688 = vmatpush1.msra.mxu0 0.0
    %689 = vmatprep.subr.mxu0 0.0
    %690 = vmatpush1.msra.mxu0 0.0
    %691 = vmatprep.subr.mxu0 0.0
    %692 = vmatpush1.msra.mxu0 0.0
    %693 = vmatprep.subr.mxu0 0.0
    %694 = vmatpush1.msra.mxu0 0.0
    %695 = vmatprep.subr.mxu0 0.0
    %696 = vmatpush1.msra.mxu0 0.0
    %697 = vmatprep.subr.mxu0 0.0
    %698 = vmatpush1.msra.mxu0 0.0
    %699 = vmatprep.subr.mxu0 0.0
    %700 = vmatpush1.msra.mxu0 0.0
    %701 = vmatprep.mubr.f32.mxu0 0.0
    %702 = vmatmul.mubr.f32.gmra.mrb[0].mxu0 %v624
    %v703 = vpop.f32.mrb[0].mxu0
    %v704 = vadd.f32 0.0, %v703
    %v705 = vpop.f32.mrb[0].mxu0
    %v706 = vadd.f32 0.0, %v705
    %707 = vdwg.mxu0
    %708 = vmatprep.subr.mxu0 %v394
    %709 = vmatpush1.msra.mxu0 %v393
    %710 = vmatprep.subr.mxu0 %v398
    %711 = vmatpush1.msra.mxu0 %v397
    %712 = vmatprep.subr.mxu0 %v402
    %713 = vmatpush1.msra.mxu0 %v401
    %714 = vmatprep.subr.mxu0 %v406
    %715 = vmatpush1.msra.mxu0 %v405
    %716 = vmatprep.subr.mxu0 %v410
    %717 = vmatpush1.msra.mxu0 %v409
    %718 = vmatprep.subr.mxu0 %v414
    %719 = vmatpush1.msra.mxu0 %v413
    %720 = vmatprep.subr.mxu0 %v418
    %721 = vmatpush1.msra.mxu0 %v417
    %722 = vmatprep.subr.mxu0 %v422
    %723 = vmatpush1.msra.mxu0 %v421
    %724 = vmatprep.subr.mxu0 %v426
    %725 = vmatpush1.msra.mxu0 %v425
    %726 = vmatprep.subr.mxu0 %v430
    %727 = vmatpush1.msra.mxu0 %v429
    %728 = vmatprep.subr.mxu0 %v434
    %729 = vmatpush1.msra.mxu0 %v433
    %730 = vmatprep.subr.mxu0 %v438
    %731 = vmatpush1.msra.mxu0 %v437
    %732 = vmatprep.subr.mxu0 %v442
    %733 = vmatpush1.msra.mxu0 %v441
    %734 = vmatprep.subr.mxu0 %v446
    %735 = vmatpush1.msra.mxu0 %v445
    %736 = vmatprep.subr.mxu0 %v450
    %737 = vmatpush1.msra.mxu0 %v449
    %738 = vmatprep.subr.mxu0 %v454
    %739 = vmatpush1.msra.mxu0 %v453
    %740 = vmatprep.subr.mxu0 0.0
    %741 = vmatpush1.msra.mxu0 0.0
    %742 = vmatprep.subr.mxu0 0.0
    %743 = vmatpush1.msra.mxu0 0.0
    %744 = vmatprep.subr.mxu0 0.0
    %745 = vmatpush1.msra.mxu0 0.0
    %746 = vmatprep.subr.mxu0 0.0
    %747 = vmatpush1.msra.mxu0 0.0
    %748 = vmatprep.subr.mxu0 0.0
    %749 = vmatpush1.msra.mxu0 0.0
    %750 = vmatprep.subr.mxu0 0.0
    %751 = vmatpush1.msra.mxu0 0.0
    %752 = vmatprep.subr.mxu0 0.0
    %753 = vmatpush1.msra.mxu0 0.0
    %754 = vmatprep.subr.mxu0 0.0
    %755 = vmatpush1.msra.mxu0 0.0
    %756 = vmatprep.subr.mxu0 0.0
    %757 = vmatpush1.msra.mxu0 0.0
    %758 = vmatprep.subr.mxu0 0.0
    %759 = vmatpush1.msra.mxu0 0.0
    %760 = vmatprep.subr.mxu0 0.0
    %761 = vmatpush1.msra.mxu0 0.0
    %762 = vmatprep.subr.mxu0 0.0
    %763 = vmatpush1.msra.mxu0 0.0
    %764 = vmatprep.subr.mxu0 0.0
    %765 = vmatpush1.msra.mxu0 0.0
    %766 = vmatprep.subr.mxu0 0.0
    %767 = vmatpush1.msra.mxu0 0.0
    %768 = vmatprep.subr.mxu0 0.0
    %769 = vmatpush1.msra.mxu0 0.0
    %770 = vmatprep.subr.mxu0 0.0
    %771 = vmatpush1.msra.mxu0 0.0
    %772 = vmatprep.mubr.f32.mxu0 0.0
    %773 = vmatmul.mubr.f32.gmra.mrb[0].mxu0 %v624
    %v774 = vpop.f32.mrb[0].mxu0
    %v775 = vadd.f32 0.0, %v774
    %v776 = vpop.f32.mrb[0].mxu0
    %v777 = vadd.f32 0.0, %v776
    %778 = vdwg.mxu0
    %v779 = vadd.f32 %v633, %v704
    %v780 = vadd.f32 %v634, %v706
    %v781 = vadd.f32 %v635, %v775
    %v782 = vadd.f32 %v636, %v777
    %v783 = vxor.u32 %v779, 2147483648
    %v784 = vmul.f32 %v783, 1.442695
    %v785 = vpow.pop %v784
    %v786 = vadd.f32 %v785, 1.0
    %v787 = vrcp.pop %v786
    %v788 = vmul.f32 1.0, %v787
    %v789 = vxor.u32 %v780, 2147483648
    %v790 = vmul.f32 %v789, 1.442695
    %v791 = vpow.pop %v790
    %v792 = vadd.f32 %v791, 1.0
    %v793 = vrcp.pop %v792
    %v794 = vmul.f32 1.0, %v793
    %v795 = vtanh.pop %v781
    %v796 = vxor.u32 %v782, 2147483648
    %v797 = vmul.f32 %v796, 1.442695
    %v798 = vpow.pop %v797
    %v799 = vadd.f32 %v798, 1.0
    %v800 = vrcp.pop %v799
    %v801 = vmul.f32 1.0, %v800
    %v802 = vmul.f32 %v794, %v622
    %v803 = vmul.f32 %v788, %v795
    %v804 = vadd.f32 %v802, %v803
    %v805 = vtanh.pop %v804
    %v806 = vmul.f32 %v801, %v805
    %vm807 = vcmp.eq.s32.totalorder %v386, 1
    %v808 = vsel %vm807, 1, 0
    %809 = vset.pattern.permute.xlu0 0
    %810 = vperm.xlu0 %809, %v808
    %v811 = vpop.permute.xlu0 %810
    %vm812 = vcmp.eq.s32.totalorder %v811, 1
    %v813 = vsel %vm812, %v806, %v631
    %s814 = scalar_lea.vmem [#allocation2], 64
    %v815 = vld [vmem:[%s814] sm:$0xff]
    %v816 = vld [vmem:[%s814 + $0x8] sm:$0xff]
    %v817 = vld [vmem:[%s814 + $0x10] sm:$0xff]
    %v818 = vld [vmem:[%s814 + $0x18] sm:$0xff]
    %819 = vmatprep.subr.mxu0 %v392
    %820 = vmatpush1.msra.mxu0 %v391
    %821 = vmatprep.subr.mxu0 %v396
    %822 = vmatpush1.msra.mxu0 %v395
    %823 = vmatprep.subr.mxu0 %v400
    %824 = vmatpush1.msra.mxu0 %v399
    %825 = vmatprep.subr.mxu0 %v404
    %826 = vmatpush1.msra.mxu0 %v403
    %827 = vmatprep.subr.mxu0 %v408
    %828 = vmatpush1.msra.mxu0 %v407
    %829 = vmatprep.subr.mxu0 %v412
    %830 = vmatpush1.msra.mxu0 %v411
    %831 = vmatprep.subr.mxu0 %v416
    %832 = vmatpush1.msra.mxu0 %v415
    %833 = vmatprep.subr.mxu0 %v420
    %834 = vmatpush1.msra.mxu0 %v419
    %835 = vmatprep.subr.mxu0 %v424
    %836 = vmatpush1.msra.mxu0 %v423
    %837 = vmatprep.subr.mxu0 %v428
    %838 = vmatpush1.msra.mxu0 %v427
    %839 = vmatprep.subr.mxu0 %v432
    %840 = vmatpush1.msra.mxu0 %v431
    %841 = vmatprep.subr.mxu0 %v436
    %842 = vmatpush1.msra.mxu0 %v435
    %843 = vmatprep.subr.mxu0 %v440
    %844 = vmatpush1.msra.mxu0 %v439
    %845 = vmatprep.subr.mxu0 %v444
    %846 = vmatpush1.msra.mxu0 %v443
    %847 = vmatprep.subr.mxu0 %v448
    %848 = vmatpush1.msra.mxu0 %v447
    %849 = vmatprep.subr.mxu0 %v452
    %850 = vmatpush1.msra.mxu0 %v451
    %851 = vmatprep.subr.mxu0 0.0
    %852 = vmatpush1.msra.mxu0 0.0
    %853 = vmatprep.subr.mxu0 0.0
    %854 = vmatpush1.msra.mxu0 0.0
    %855 = vmatprep.subr.mxu0 0.0
    %856 = vmatpush1.msra.mxu0 0.0
    %857 = vmatprep.subr.mxu0 0.0
    %858 = vmatpush1.msra.mxu0 0.0
    %859 = vmatprep.subr.mxu0 0.0
    %860 = vmatpush1.msra.mxu0 0.0
    %861 = vmatprep.subr.mxu0 0.0
    %862 = vmatpush1.msra.mxu0 0.0
    %863 = vmatprep.subr.mxu0 0.0
    %864 = vmatpush1.msra.mxu0 0.0
    %865 = vmatprep.subr.mxu0 0.0
    %866 = vmatpush1.msra.mxu0 0.0
    %867 = vmatprep.subr.mxu0 0.0
    %868 = vmatpush1.msra.mxu0 0.0
    %869 = vmatprep.subr.mxu0 0.0
    %870 = vmatpush1.msra.mxu0 0.0
    %871 = vmatprep.subr.mxu0 0.0
    %872 = vmatpush1.msra.mxu0 0.0
    %873 = vmatprep.subr.mxu0 0.0
    %874 = vmatpush1.msra.mxu0 0.0
    %875 = vmatprep.subr.mxu0 0.0
    %876 = vmatpush1.msra.mxu0 0.0
    %877 = vmatprep.subr.mxu0 0.0
    %878 = vmatpush1.msra.mxu0 0.0
    %879 = vmatprep.subr.mxu0 0.0
    %880 = vmatpush1.msra.mxu0 0.0
    %881 = vmatprep.subr.mxu0 0.0
    %882 = vmatpush1.msra.mxu0 0.0
    %883 = vmatprep.mubr.f32.mxu0 0.0
    %884 = vmatmul.mubr.f32.gmra.mrb[0].mxu0 %v806
    %v885 = vpop.f32.mrb[0].mxu0
    %v886 = vadd.f32 0.0, %v885
    %v887 = vpop.f32.mrb[0].mxu0
    %v888 = vadd.f32 0.0, %v887
    %889 = vdwg.mxu0
    %890 = vmatprep.subr.mxu0 %v394
    %891 = vmatpush1.msra.mxu0 %v393
    %892 = vmatprep.subr.mxu0 %v398
    %893 = vmatpush1.msra.mxu0 %v397
    %894 = vmatprep.subr.mxu0 %v402
    %895 = vmatpush1.msra.mxu0 %v401
    %896 = vmatprep.subr.mxu0 %v406
    %897 = vmatpush1.msra.mxu0 %v405
    %898 = vmatprep.subr.mxu0 %v410
    %899 = vmatpush1.msra.mxu0 %v409
    %900 = vmatprep.subr.mxu0 %v414
    %901 = vmatpush1.msra.mxu0 %v413
    %902 = vmatprep.subr.mxu0 %v418
    %903 = vmatpush1.msra.mxu0 %v417
    %904 = vmatprep.subr.mxu0 %v422
    %905 = vmatpush1.msra.mxu0 %v421
    %906 = vmatprep.subr.mxu0 %v426
    %907 = vmatpush1.msra.mxu0 %v425
    %908 = vmatprep.subr.mxu0 %v430
    %909 = vmatpush1.msra.mxu0 %v429
    %910 = vmatprep.subr.mxu0 %v434
    %911 = vmatpush1.msra.mxu0 %v433
    %912 = vmatprep.subr.mxu0 %v438
    %913 = vmatpush1.msra.mxu0 %v437
    %914 = vmatprep.subr.mxu0 %v442
    %915 = vmatpush1.msra.mxu0 %v441
    %916 = vmatprep.subr.mxu0 %v446
    %917 = vmatpush1.msra.mxu0 %v445
    %918 = vmatprep.subr.mxu0 %v450
    %919 = vmatpush1.msra.mxu0 %v449
    %920 = vmatprep.subr.mxu0 %v454
    %921 = vmatpush1.msra.mxu0 %v453
    %922 = vmatprep.subr.mxu0 0.0
    %923 = vmatpush1.msra.mxu0 0.0
    %924 = vmatprep.subr.mxu0 0.0
    %925 = vmatpush1.msra.mxu0 0.0
    %926 = vmatprep.subr.mxu0 0.0
    %927 = vmatpush1.msra.mxu0 0.0
    %928 = vmatprep.subr.mxu0 0.0
    %929 = vmatpush1.msra.mxu0 0.0
    %930 = vmatprep.subr.mxu0 0.0
    %931 = vmatpush1.msra.mxu0 0.0
    %932 = vmatprep.subr.mxu0 0.0
    %933 = vmatpush1.msra.mxu0 0.0
    %934 = vmatprep.subr.mxu0 0.0
    %935 = vmatpush1.msra.mxu0 0.0
    %936 = vmatprep.subr.mxu0 0.0
    %937 = vmatpush1.msra.mxu0 0.0
    %938 = vmatprep.subr.mxu0 0.0
    %939 = vmatpush1.msra.mxu0 0.0
    %940 = vmatprep.subr.mxu0 0.0
    %941 = vmatpush1.msra.mxu0 0.0
    %942 = vmatprep.subr.mxu0 0.0
    %943 = vmatpush1.msra.mxu0 0.0
    %944 = vmatprep.subr.mxu0 0.0
    %945 = vmatpush1.msra.mxu0 0.0
    %946 = vmatprep.subr.mxu0 0.0
    %947 = vmatpush1.msra.mxu0 0.0
    %948 = vmatprep.subr.mxu0 0.0
    %949 = vmatpush1.msra.mxu0 0.0
    %950 = vmatprep.subr.mxu0 0.0
    %951 = vmatpush1.msra.mxu0 0.0
    %952 = vmatprep.subr.mxu0 0.0
    %953 = vmatpush1.msra.mxu0 0.0
    %954 = vmatprep.mubr.f32.mxu0 0.0
    %955 = vmatmul.mubr.f32.gmra.mrb[0].mxu0 %v806
    %v956 = vpop.f32.mrb[0].mxu0
    %v957 = vadd.f32 0.0, %v956
    %v958 = vpop.f32.mrb[0].mxu0
    %v959 = vadd.f32 0.0, %v958
    %960 = vdwg.mxu0
    %v961 = vadd.f32 %v815, %v886
    %v962 = vadd.f32 %v816, %v888
    %v963 = vadd.f32 %v817, %v957
    %v964 = vadd.f32 %v818, %v959
    %v965 = vxor.u32 %v961, 2147483648
    %v966 = vmul.f32 %v965, 1.442695
    %v967 = vpow.pop %v966
    %v968 = vadd.f32 %v967, 1.0
    %v969 = vrcp.pop %v968
    %v970 = vmul.f32 1.0, %v969
    %v971 = vxor.u32 %v962, 2147483648
    %v972 = vmul.f32 %v971, 1.442695
    %v973 = vpow.pop %v972
    %v974 = vadd.f32 %v973, 1.0
    %v975 = vrcp.pop %v974
    %v976 = vmul.f32 1.0, %v975
    %v977 = vtanh.pop %v963
    %v978 = vxor.u32 %v964, 2147483648
    %v979 = vmul.f32 %v978, 1.442695
    %v980 = vpow.pop %v979
    %v981 = vadd.f32 %v980, 1.0
    %v982 = vrcp.pop %v981
    %v983 = vmul.f32 1.0, %v982
    %v984 = vmul.f32 %v976, %v804
    %v985 = vmul.f32 %v970, %v977
    %v986 = vadd.f32 %v984, %v985
    %v987 = vtanh.pop %v986
    %v988 = vmul.f32 %v983, %v987
    %vm989 = vcmp.eq.s32.totalorder %v386, 2
    %v990 = vsel %vm989, 1, 0
    %991 = vset.pattern.permute.xlu0 0
    %992 = vperm.xlu0 %991, %v990
    %v993 = vpop.permute.xlu0 %992
    %vm994 = vcmp.eq.s32.totalorder %v993, 1
    %v995 = vsel %vm994, %v988, %v813
    %s996 = scalar_lea.vmem [#allocation2], 96
    %v997 = vld [vmem:[%s996] sm:$0xff]
    %v998 = vld [vmem:[%s996 + $0x8] sm:$0xff]
    %v999 = vld [vmem:[%s996 + $0x10] sm:$0xff]
    %v1000 = vld [vmem:[%s996 + $0x18] sm:$0xff]
    %1001 = vmatprep.subr.mxu0 %v392
    %1002 = vmatpush1.msra.mxu0 %v391
    %1003 = vmatprep.subr.mxu0 %v396
    %1004 = vmatpush1.msra.mxu0 %v395
    %1005 = vmatprep.subr.mxu0 %v400
    %1006 = vmatpush1.msra.mxu0 %v399
    %1007 = vmatprep.subr.mxu0 %v404
    %1008 = vmatpush1.msra.mxu0 %v403
    %1009 = vmatprep.subr.mxu0 %v408
    %1010 = vmatpush1.msra.mxu0 %v407
    %1011 = vmatprep.subr.mxu0 %v412
    %1012 = vmatpush1.msra.mxu0 %v411
    %1013 = vmatprep.subr.mxu0 %v416
    %1014 = vmatpush1.msra.mxu0 %v415
    %1015 = vmatprep.subr.mxu0 %v420
    %1016 = vmatpush1.msra.mxu0 %v419
    %1017 = vmatprep.subr.mxu0 %v424
    %1018 = vmatpush1.msra.mxu0 %v423
    %1019 = vmatprep.subr.mxu0 %v428
    %1020 = vmatpush1.msra.mxu0 %v427
    %1021 = vmatprep.subr.mxu0 %v432
    %1022 = vmatpush1.msra.mxu0 %v431
    %1023 = vmatprep.subr.mxu0 %v436
    %1024 = vmatpush1.msra.mxu0 %v435
    %1025 = vmatprep.subr.mxu0 %v440
    %1026 = vmatpush1.msra.mxu0 %v439
    %1027 = vmatprep.subr.mxu0 %v444
    %1028 = vmatpush1.msra.mxu0 %v443
    %1029 = vmatprep.subr.mxu0 %v448
    %1030 = vmatpush1.msra.mxu0 %v447
    %1031 = vmatprep.subr.mxu0 %v452
    %1032 = vmatpush1.msra.mxu0 %v451
    %1033 = vmatprep.subr.mxu0 0.0
    %1034 = vmatpush1.msra.mxu0 0.0
    %1035 = vmatprep.subr.mxu0 0.0
    %1036 = vmatpush1.msra.mxu0 0.0
    %1037 = vmatprep.subr.mxu0 0.0
    %1038 = vmatpush1.msra.mxu0 0.0
    %1039 = vmatprep.subr.mxu0 0.0
    %1040 = vmatpush1.msra.mxu0 0.0
    %1041 = vmatprep.subr.mxu0 0.0
    %1042 = vmatpush1.msra.mxu0 0.0
    %1043 = vmatprep.subr.mxu0 0.0
    %1044 = vmatpush1.msra.mxu0 0.0
    %1045 = vmatprep.subr.mxu0 0.0
    %1046 = vmatpush1.msra.mxu0 0.0
    %1047 = vmatprep.subr.mxu0 0.0
    %1048 = vmatpush1.msra.mxu0 0.0
    %1049 = vmatprep.subr.mxu0 0.0
    %1050 = vmatpush1.msra.mxu0 0.0
    %1051 = vmatprep.subr.mxu0 0.0
    %1052 = vmatpush1.msra.mxu0 0.0
    %1053 = vmatprep.subr.mxu0 0.0
    %1054 = vmatpush1.msra.mxu0 0.0
    %1055 = vmatprep.subr.mxu0 0.0
    %1056 = vmatpush1.msra.mxu0 0.0
    %1057 = vmatprep.subr.mxu0 0.0
    %1058 = vmatpush1.msra.mxu0 0.0
    %1059 = vmatprep.subr.mxu0 0.0
    %1060 = vmatpush1.msra.mxu0 0.0
    %1061 = vmatprep.subr.mxu0 0.0
    %1062 = vmatpush1.msra.mxu0 0.0
    %1063 = vmatprep.subr.mxu0 0.0
    %1064 = vmatpush1.msra.mxu0 0.0
    %1065 = vmatprep.mubr.f32.mxu0 0.0
    %1066 = vmatmul.mubr.f32.gmra.mrb[0].mxu0 %v988
    %v1067 = vpop.f32.mrb[0].mxu0
    %v1068 = vadd.f32 0.0, %v1067
    %v1069 = vpop.f32.mrb[0].mxu0
    %v1070 = vadd.f32 0.0, %v1069
    %1071 = vdwg.mxu0
    %1072 = vmatprep.subr.mxu0 %v394
    %1073 = vmatpush1.msra.mxu0 %v393
    %1074 = vmatprep.subr.mxu0 %v398
    %1075 = vmatpush1.msra.mxu0 %v397
    %1076 = vmatprep.subr.mxu0 %v402
    %1077 = vmatpush1.msra.mxu0 %v401
    %1078 = vmatprep.subr.mxu0 %v406
    %1079 = vmatpush1.msra.mxu0 %v405
    %1080 = vmatprep.subr.mxu0 %v410
    %1081 = vmatpush1.msra.mxu0 %v409
    %1082 = vmatprep.subr.mxu0 %v414
    %1083 = vmatpush1.msra.mxu0 %v413
    %1084 = vmatprep.subr.mxu0 %v418
    %1085 = vmatpush1.msra.mxu0 %v417
    %1086 = vmatprep.subr.mxu0 %v422
    %1087 = vmatpush1.msra.mxu0 %v421
    %1088 = vmatprep.subr.mxu0 %v426
    %1089 = vmatpush1.msra.mxu0 %v425
    %1090 = vmatprep.subr.mxu0 %v430
    %1091 = vmatpush1.msra.mxu0 %v429
    %1092 = vmatprep.subr.mxu0 %v434
    %1093 = vmatpush1.msra.mxu0 %v433
    %1094 = vmatprep.subr.mxu0 %v438
    %1095 = vmatpush1.msra.mxu0 %v437
    %1096 = vmatprep.subr.mxu0 %v442
    %1097 = vmatpush1.msra.mxu0 %v441
    %1098 = vmatprep.subr.mxu0 %v446
    %1099 = vmatpush1.msra.mxu0 %v445
    %1100 = vmatprep.subr.mxu0 %v450
    %1101 = vmatpush1.msra.mxu0 %v449
    %1102 = vmatprep.subr.mxu0 %v454
    %1103 = vmatpush1.msra.mxu0 %v453
    %1104 = vmatprep.subr.mxu0 0.0
    %1105 = vmatpush1.msra.mxu0 0.0
    %1106 = vmatprep.subr.mxu0 0.0
    %1107 = vmatpush1.msra.mxu0 0.0
    %1108 = vmatprep.subr.mxu0 0.0
    %1109 = vmatpush1.msra.mxu0 0.0
    %1110 = vmatprep.subr.mxu0 0.0
    %1111 = vmatpush1.msra.mxu0 0.0
    %1112 = vmatprep.subr.mxu0 0.0
    %1113 = vmatpush1.msra.mxu0 0.0
    %1114 = vmatprep.subr.mxu0 0.0
    %1115 = vmatpush1.msra.mxu0 0.0
    %1116 = vmatprep.subr.mxu0 0.0
    %1117 = vmatpush1.msra.mxu0 0.0
    %1118 = vmatprep.subr.mxu0 0.0
    %1119 = vmatpush1.msra.mxu0 0.0
    %1120 = vmatprep.subr.mxu0 0.0
    %1121 = vmatpush1.msra.mxu0 0.0
    %1122 = vmatprep.subr.mxu0 0.0
    %1123 = vmatpush1.msra.mxu0 0.0
    %1124 = vmatprep.subr.mxu0 0.0
    %1125 = vmatpush1.msra.mxu0 0.0
    %1126 = vmatprep.subr.mxu0 0.0
    %1127 = vmatpush1.msra.mxu0 0.0
    %1128 = vmatprep.subr.mxu0 0.0
    %1129 = vmatpush1.msra.mxu0 0.0
    %1130 = vmatprep.subr.mxu0 0.0
    %1131 = vmatpush1.msra.mxu0 0.0
    %1132 = vmatprep.subr.mxu0 0.0
    %1133 = vmatpush1.msra.mxu0 0.0
    %1134 = vmatprep.subr.mxu0 0.0
    %1135 = vmatpush1.msra.mxu0 0.0
    %1136 = vmatprep.mubr.f32.mxu0 0.0
    %1137 = vmatmul.mubr.f32.gmra.mrb[0].mxu0 %v988
    %v1138 = vpop.f32.mrb[0].mxu0
    %v1139 = vadd.f32 0.0, %v1138
    %v1140 = vpop.f32.mrb[0].mxu0
    %v1141 = vadd.f32 0.0, %v1140
    %1142 = vdwg.mxu0
    %v1143 = vadd.f32 %v997, %v1068
    %v1144 = vadd.f32 %v998, %v1070
    %v1145 = vadd.f32 %v999, %v1139
    %v1146 = vadd.f32 %v1000, %v1141
    %v1147 = vxor.u32 %v1143, 2147483648
    %v1148 = vmul.f32 %v1147, 1.442695
    %v1149 = vpow.pop %v1148
    %v1150 = vadd.f32 %v1149, 1.0
    %v1151 = vrcp.pop %v1150
    %v1152 = vmul.f32 1.0, %v1151
    %v1153 = vxor.u32 %v1144, 2147483648
    %v1154 = vmul.f32 %v1153, 1.442695
    %v1155 = vpow.pop %v1154
    %v1156 = vadd.f32 %v1155, 1.0
    %v1157 = vrcp.pop %v1156
    %v1158 = vmul.f32 1.0, %v1157
    %v1159 = vtanh.pop %v1145
    %v1160 = vxor.u32 %v1146, 2147483648
    %v1161 = vmul.f32 %v1160, 1.442695
    %v1162 = vpow.pop %v1161
    %v1163 = vadd.f32 %v1162, 1.0
    %v1164 = vrcp.pop %v1163
    %v1165 = vmul.f32 1.0, %v1164
    %v1166 = vmul.f32 %v1158, %v986
    %v1167 = vmul.f32 %v1152, %v1159
    %v1168 = vadd.f32 %v1166, %v1167
    %v1169 = vtanh.pop %v1168
    %v1170 = vmul.f32 %v1165, %v1169
    %vm1171 = vcmp.eq.s32.totalorder %v386, 3
    %v1172 = vsel %vm1171, 1, 0
    %1173 = vset.pattern.permute.xlu0 0
    %1174 = vperm.xlu0 %1173, %v1172
    %v1175 = vpop.permute.xlu0 %1174
    %vm1176 = vcmp.eq.s32.totalorder %v1175, 1
    %v1177 = vsel %vm1176, %v1170, %v995
    %s1178 = scalar_lea.vmem [#allocation2], 128
    %v1179 = vld [vmem:[%s1178] sm:$0xff]
    %v1180 = vld [vmem:[%s1178 + $0x8] sm:$0xff]
    %v1181 = vld [vmem:[%s1178 + $0x10] sm:$0xff]
    %v1182 = vld [vmem:[%s1178 + $0x18] sm:$0xff]
    %1183 = vmatprep.subr.mxu0 %v392
    %1184 = vmatpush1.msra.mxu0 %v391
    %1185 = vmatprep.subr.mxu0 %v396
    %1186 = vmatpush1.msra.mxu0 %v395
    %1187 = vmatprep.subr.mxu0 %v400
    %1188 = vmatpush1.msra.mxu0 %v399
    %1189 = vmatprep.subr.mxu0 %v404
    %1190 = vmatpush1.msra.mxu0 %v403
    %1191 = vmatprep.subr.mxu0 %v408
    %1192 = vmatpush1.msra.mxu0 %v407
    %1193 = vmatprep.subr.mxu0 %v412
    %1194 = vmatpush1.msra.mxu0 %v411
    %1195 = vmatprep.subr.mxu0 %v416
    %1196 = vmatpush1.msra.mxu0 %v415
    %1197 = vmatprep.subr.mxu0 %v420
    %1198 = vmatpush1.msra.mxu0 %v419
    %1199 = vmatprep.subr.mxu0 %v424
    %1200 = vmatpush1.msra.mxu0 %v423
    %1201 = vmatprep.subr.mxu0 %v428
    %1202 = vmatpush1.msra.mxu0 %v427
    %1203 = vmatprep.subr.mxu0 %v432
    %1204 = vmatpush1.msra.mxu0 %v431
    %1205 = vmatprep.subr.mxu0 %v436
    %1206 = vmatpush1.msra.mxu0 %v435
    %1207 = vmatprep.subr.mxu0 %v440
    %1208 = vmatpush1.msra.mxu0 %v439
    %1209 = vmatprep.subr.mxu0 %v444
    %1210 = vmatpush1.msra.mxu0 %v443
    %1211 = vmatprep.subr.mxu0 %v448
    %1212 = vmatpush1.msra.mxu0 %v447
    %1213 = vmatprep.subr.mxu0 %v452
    %1214 = vmatpush1.msra.mxu0 %v451
    %1215 = vmatprep.subr.mxu0 0.0
    %1216 = vmatpush1.msra.mxu0 0.0
    %1217 = vmatprep.subr.mxu0 0.0
    %1218 = vmatpush1.msra.mxu0 0.0
    %1219 = vmatprep.subr.mxu0 0.0
    %1220 = vmatpush1.msra.mxu0 0.0
    %1221 = vmatprep.subr.mxu0 0.0
    %1222 = vmatpush1.msra.mxu0 0.0
    %1223 = vmatprep.subr.mxu0 0.0
    %1224 = vmatpush1.msra.mxu0 0.0
    %1225 = vmatprep.subr.mxu0 0.0
    %1226 = vmatpush1.msra.mxu0 0.0
    %1227 = vmatprep.subr.mxu0 0.0
    %1228 = vmatpush1.msra.mxu0 0.0
    %1229 = vmatprep.subr.mxu0 0.0
    %1230 = vmatpush1.msra.mxu0 0.0
    %1231 = vmatprep.subr.mxu0 0.0
    %1232 = vmatpush1.msra.mxu0 0.0
    %1233 = vmatprep.subr.mxu0 0.0
    %1234 = vmatpush1.msra.mxu0 0.0
    %1235 = vmatprep.subr.mxu0 0.0
    %1236 = vmatpush1.msra.mxu0 0.0
    %1237 = vmatprep.subr.mxu0 0.0
    %1238 = vmatpush1.msra.mxu0 0.0
    %1239 = vmatprep.subr.mxu0 0.0
    %1240 = vmatpush1.msra.mxu0 0.0
    %1241 = vmatprep.subr.mxu0 0.0
    %1242 = vmatpush1.msra.mxu0 0.0
    %1243 = vmatprep.subr.mxu0 0.0
    %1244 = vmatpush1.msra.mxu0 0.0
    %1245 = vmatprep.subr.mxu0 0.0
    %1246 = vmatpush1.msra.mxu0 0.0
    %1247 = vmatprep.mubr.f32.mxu0 0.0
    %1248 = vmatmul.mubr.f32.gmra.mrb[0].mxu0 %v1170
    %v1249 = vpop.f32.mrb[0].mxu0
    %v1250 = vadd.f32 0.0, %v1249
    %v1251 = vpop.f32.mrb[0].mxu0
    %v1252 = vadd.f32 0.0, %v1251
    %1253 = vdwg.mxu0
    %1254 = vmatprep.subr.mxu0 %v394
    %1255 = vmatpush1.msra.mxu0 %v393
    %1256 = vmatprep.subr.mxu0 %v398
    %1257 = vmatpush1.msra.mxu0 %v397
    %1258 = vmatprep.subr.mxu0 %v402
    %1259 = vmatpush1.msra.mxu0 %v401
    %1260 = vmatprep.subr.mxu0 %v406
    %1261 = vmatpush1.msra.mxu0 %v405
    %1262 = vmatprep.subr.mxu0 %v410
    %1263 = vmatpush1.msra.mxu0 %v409
    %1264 = vmatprep.subr.mxu0 %v414
    %1265 = vmatpush1.msra.mxu0 %v413
    %1266 = vmatprep.subr.mxu0 %v418
    %1267 = vmatpush1.msra.mxu0 %v417
    %1268 = vmatprep.subr.mxu0 %v422
    %1269 = vmatpush1.msra.mxu0 %v421
    %1270 = vmatprep.subr.mxu0 %v426
    %1271 = vmatpush1.msra.mxu0 %v425
    %1272 = vmatprep.subr.mxu0 %v430
    %1273 = vmatpush1.msra.mxu0 %v429
    %1274 = vmatprep.subr.mxu0 %v434
    %1275 = vmatpush1.msra.mxu0 %v433
    %1276 = vmatprep.subr.mxu0 %v438
    %1277 = vmatpush1.msra.mxu0 %v437
    %1278 = vmatprep.subr.mxu0 %v442
    %1279 = vmatpush1.msra.mxu0 %v441
    %1280 = vmatprep.subr.mxu0 %v446
    %1281 = vmatpush1.msra.mxu0 %v445
    %1282 = vmatprep.subr.mxu0 %v450
    %1283 = vmatpush1.msra.mxu0 %v449
    %1284 = vmatprep.subr.mxu0 %v454
    %1285 = vmatpush1.msra.mxu0 %v453
    %1286 = vmatprep.subr.mxu0 0.0
    %1287 = vmatpush1.msra.mxu0 0.0
    %1288 = vmatprep.subr.mxu0 0.0
    %1289 = vmatpush1.msra.mxu0 0.0
    %1290 = vmatprep.subr.mxu0 0.0
    %1291 = vmatpush1.msra.mxu0 0.0
    %1292 = vmatprep.subr.mxu0 0.0
    %1293 = vmatpush1.msra.mxu0 0.0
    %1294 = vmatprep.subr.mxu0 0.0
    %1295 = vmatpush1.msra.mxu0 0.0
    %1296 = vmatprep.subr.mxu0 0.0
    %1297 = vmatpush1.msra.mxu0 0.0
    %1298 = vmatprep.subr.mxu0 0.0
    %1299 = vmatpush1.msra.mxu0 0.0
    %1300 = vmatprep.subr.mxu0 0.0
    %1301 = vmatpush1.msra.mxu0 0.0
    %1302 = vmatprep.subr.mxu0 0.0
    %1303 = vmatpush1.msra.mxu0 0.0
    %1304 = vmatprep.subr.mxu0 0.0
    %1305 = vmatpush1.msra.mxu0 0.0
    %1306 = vmatprep.subr.mxu0 0.0
    %1307 = vmatpush1.msra.mxu0 0.0
    %1308 = vmatprep.subr.mxu0 0.0
    %1309 = vmatpush1.msra.mxu0 0.0
    %1310 = vmatprep.subr.mxu0 0.0
    %1311 = vmatpush1.msra.mxu0 0.0
    %1312 = vmatprep.subr.mxu0 0.0
    %1313 = vmatpush1.msra.mxu0 0.0
    %1314 = vmatprep.subr.mxu0 0.0
    %1315 = vmatpush1.msra.mxu0 0.0
    %1316 = vmatprep.subr.mxu0 0.0
    %1317 = vmatpush1.msra.mxu0 0.0
    %1318 = vmatprep.mubr.f32.mxu0 0.0
    %1319 = vmatmul.mubr.f32.gmra.mrb[0].mxu0 %v1170
    %v1320 = vpop.f32.mrb[0].mxu0
    %v1321 = vadd.f32 0.0, %v1320
    %v1322 = vpop.f32.mrb[0].mxu0
    %v1323 = vadd.f32 0.0, %v1322
    %1324 = vdwg.mxu0
    %v1325 = vadd.f32 %v1179, %v1250
    %v1326 = vadd.f32 %v1180, %v1252
    %v1327 = vadd.f32 %v1181, %v1321
    %v1328 = vadd.f32 %v1182, %v1323
    %v1329 = vxor.u32 %v1325, 2147483648
    %v1330 = vmul.f32 %v1329, 1.442695
    %v1331 = vpow.pop %v1330
    %v1332 = vadd.f32 %v1331, 1.0
    %v1333 = vrcp.pop %v1332
    %v1334 = vmul.f32 1.0, %v1333
    %v1335 = vxor.u32 %v1326, 2147483648
    %v1336 = vmul.f32 %v1335, 1.442695
    %v1337 = vpow.pop %v1336
    %v1338 = vadd.f32 %v1337, 1.0
    %v1339 = vrcp.pop %v1338
    %v1340 = vmul.f32 1.0, %v1339
    %v1341 = vtanh.pop %v1327
    %v1342 = vxor.u32 %v1328, 2147483648
    %v1343 = vmul.f32 %v1342, 1.442695
    %v1344 = vpow.pop %v1343
    %v1345 = vadd.f32 %v1344, 1.0
    %v1346 = vrcp.pop %v1345
    %v1347 = vmul.f32 1.0, %v1346
    %v1348 = vmul.f32 %v1340, %v1168
    %v1349 = vmul.f32 %v1334, %v1341
    %v1350 = vadd.f32 %v1348, %v1349
    %v1351 = vtanh.pop %v1350
    %v1352 = vmul.f32 %v1347, %v1351
    %vm1353 = vcmp.eq.s32.totalorder %v386, 4
    %v1354 = vsel %vm1353, 1, 0
    %1355 = vset.pattern.permute.xlu0 0
    %1356 = vperm.xlu0 %1355, %v1354
    %v1357 = vpop.permute.xlu0 %1356
    %vm1358 = vcmp.eq.s32.totalorder %v1357, 1
    %v1359 = vsel %vm1358, %v1352, %v1177
    %s1360 = scalar_lea.vmem [#allocation2], 160
    %v1361 = vld [vmem:[%s1360] sm:$0xff]
    %v1362 = vld [vmem:[%s1360 + $0x8] sm:$0xff]
    %v1363 = vld [vmem:[%s1360 + $0x10] sm:$0xff]
    %v1364 = vld [vmem:[%s1360 + $0x18] sm:$0xff]
    %1365 = vmatprep.subr.mxu0 %v392
    %1366 = vmatpush1.msra.mxu0 %v391
    %1367 = vmatprep.subr.mxu0 %v396
    %1368 = vmatpush1.msra.mxu0 %v395
    %1369 = vmatprep.subr.mxu0 %v400
    %1370 = vmatpush1.msra.mxu0 %v399
    %1371 = vmatprep.subr.mxu0 %v404
    %1372 = vmatpush1.msra.mxu0 %v403
    %1373 = vmatprep.subr.mxu0 %v408
    %1374 = vmatpush1.msra.mxu0 %v407
    %1375 = vmatprep.subr.mxu0 %v412
    %1376 = vmatpush1.msra.mxu0 %v411
    %1377 = vmatprep.subr.mxu0 %v416
    %1378 = vmatpush1.msra.mxu0 %v415
    %1379 = vmatprep.subr.mxu0 %v420
    %1380 = vmatpush1.msra.mxu0 %v419
    %1381 = vmatprep.subr.mxu0 %v424
    %1382 = vmatpush1.msra.mxu0 %v423
    %1383 = vmatprep.subr.mxu0 %v428
    %1384 = vmatpush1.msra.mxu0 %v427
    %1385 = vmatprep.subr.mxu0 %v432
    %1386 = vmatpush1.msra.mxu0 %v431
    %1387 = vmatprep.subr.mxu0 %v436
    %1388 = vmatpush1.msra.mxu0 %v435
    %1389 = vmatprep.subr.mxu0 %v440
    %1390 = vmatpush1.msra.mxu0 %v439
    %1391 = vmatprep.subr.mxu0 %v444
    %1392 = vmatpush1.msra.mxu0 %v443
    %1393 = vmatprep.subr.mxu0 %v448
    %1394 = vmatpush1.msra.mxu0 %v447
    %1395 = vmatprep.subr.mxu0 %v452
    %1396 = vmatpush1.msra.mxu0 %v451
    %1397 = vmatprep.subr.mxu0 0.0
    %1398 = vmatpush1.msra.mxu0 0.0
    %1399 = vmatprep.subr.mxu0 0.0
    %1400 = vmatpush1.msra.mxu0 0.0
    %1401 = vmatprep.subr.mxu0 0.0
    %1402 = vmatpush1.msra.mxu0 0.0
    %1403 = vmatprep.subr.mxu0 0.0
    %1404 = vmatpush1.msra.mxu0 0.0
    %1405 = vmatprep.subr.mxu0 0.0
    %1406 = vmatpush1.msra.mxu0 0.0
    %1407 = vmatprep.subr.mxu0 0.0
    %1408 = vmatpush1.msra.mxu0 0.0
    %1409 = vmatprep.subr.mxu0 0.0
    %1410 = vmatpush1.msra.mxu0 0.0
    %1411 = vmatprep.subr.mxu0 0.0
    %1412 = vmatpush1.msra.mxu0 0.0
    %1413 = vmatprep.subr.mxu0 0.0
    %1414 = vmatpush1.msra.mxu0 0.0
    %1415 = vmatprep.subr.mxu0 0.0
    %1416 = vmatpush1.msra.mxu0 0.0
    %1417 = vmatprep.subr.mxu0 0.0
    %1418 = vmatpush1.msra.mxu0 0.0
    %1419 = vmatprep.subr.mxu0 0.0
    %1420 = vmatpush1.msra.mxu0 0.0
    %1421 = vmatprep.subr.mxu0 0.0
    %1422 = vmatpush1.msra.mxu0 0.0
    %1423 = vmatprep.subr.mxu0 0.0
    %1424 = vmatpush1.msra.mxu0 0.0
    %1425 = vmatprep.subr.mxu0 0.0
    %1426 = vmatpush1.msra.mxu0 0.0
    %1427 = vmatprep.subr.mxu0 0.0
    %1428 = vmatpush1.msra.mxu0 0.0
    %1429 = vmatprep.mubr.f32.mxu0 0.0
    %1430 = vmatmul.mubr.f32.gmra.mrb[0].mxu0 %v1352
    %v1431 = vpop.f32.mrb[0].mxu0
    %v1432 = vadd.f32 0.0, %v1431
    %v1433 = vpop.f32.mrb[0].mxu0
    %v1434 = vadd.f32 0.0, %v1433
    %1435 = vdwg.mxu0
    %1436 = vmatprep.subr.mxu0 %v394
    %1437 = vmatpush1.msra.mxu0 %v393
    %1438 = vmatprep.subr.mxu0 %v398
    %1439 = vmatpush1.msra.mxu0 %v397
    %1440 = vmatprep.subr.mxu0 %v402
    %1441 = vmatpush1.msra.mxu0 %v401
    %1442 = vmatprep.subr.mxu0 %v406
    %1443 = vmatpush1.msra.mxu0 %v405
    %1444 = vmatprep.subr.mxu0 %v410
    %1445 = vmatpush1.msra.mxu0 %v409
    %1446 = vmatprep.subr.mxu0 %v414
    %1447 = vmatpush1.msra.mxu0 %v413
    %1448 = vmatprep.subr.mxu0 %v418
    %1449 = vmatpush1.msra.mxu0 %v417
    %1450 = vmatprep.subr.mxu0 %v422
    %1451 = vmatpush1.msra.mxu0 %v421
    %1452 = vmatprep.subr.mxu0 %v426
    %1453 = vmatpush1.msra.mxu0 %v425
    %1454 = vmatprep.subr.mxu0 %v430
    %1455 = vmatpush1.msra.mxu0 %v429
    %1456 = vmatprep.subr.mxu0 %v434
    %1457 = vmatpush1.msra.mxu0 %v433
    %1458 = vmatprep.subr.mxu0 %v438
    %1459 = vmatpush1.msra.mxu0 %v437
    %1460 = vmatprep.subr.mxu0 %v442
    %1461 = vmatpush1.msra.mxu0 %v441
    %1462 = vmatprep.subr.mxu0 %v446
    %1463 = vmatpush1.msra.mxu0 %v445
    %1464 = vmatprep.subr.mxu0 %v450
    %1465 = vmatpush1.msra.mxu0 %v449
    %1466 = vmatprep.subr.mxu0 %v454
    %1467 = vmatpush1.msra.mxu0 %v453
    %1468 = vmatprep.subr.mxu0 0.0
    %1469 = vmatpush1.msra.mxu0 0.0
    %1470 = vmatprep.subr.mxu0 0.0
    %1471 = vmatpush1.msra.mxu0 0.0
    %1472 = vmatprep.subr.mxu0 0.0
    %1473 = vmatpush1.msra.mxu0 0.0
    %1474 = vmatprep.subr.mxu0 0.0
    %1475 = vmatpush1.msra.mxu0 0.0
    %1476 = vmatprep.subr.mxu0 0.0
    %1477 = vmatpush1.msra.mxu0 0.0
    %1478 = vmatprep.subr.mxu0 0.0
    %1479 = vmatpush1.msra.mxu0 0.0
    %1480 = vmatprep.subr.mxu0 0.0
    %1481 = vmatpush1.msra.mxu0 0.0
    %1482 = vmatprep.subr.mxu0 0.0
    %1483 = vmatpush1.msra.mxu0 0.0
    %1484 = vmatprep.subr.mxu0 0.0
    %1485 = vmatpush1.msra.mxu0 0.0
    %1486 = vmatprep.subr.mxu0 0.0
    %1487 = vmatpush1.msra.mxu0 0.0
    %1488 = vmatprep.subr.mxu0 0.0
    %1489 = vmatpush1.msra.mxu0 0.0
    %1490 = vmatprep.subr.mxu0 0.0
    %1491 = vmatpush1.msra.mxu0 0.0
    %1492 = vmatprep.subr.mxu0 0.0
    %1493 = vmatpush1.msra.mxu0 0.0
    %1494 = vmatprep.subr.mxu0 0.0
    %1495 = vmatpush1.msra.mxu0 0.0
    %1496 = vmatprep.subr.mxu0 0.0
    %1497 = vmatpush1.msra.mxu0 0.0
    %1498 = vmatprep.subr.mxu0 0.0
    %1499 = vmatpush1.msra.mxu0 0.0
    %1500 = vmatprep.mubr.f32.mxu0 0.0
    %1501 = vmatmul.mubr.f32.gmra.mrb[0].mxu0 %v1352
    %v1502 = vpop.f32.mrb[0].mxu0
    %v1503 = vadd.f32 0.0, %v1502
    %v1504 = vpop.f32.mrb[0].mxu0
    %v1505 = vadd.f32 0.0, %v1504
    %1506 = vdwg.mxu0
    %v1507 = vadd.f32 %v1361, %v1432
    %v1508 = vadd.f32 %v1362, %v1434
    %v1509 = vadd.f32 %v1363, %v1503
    %v1510 = vadd.f32 %v1364, %v1505
    %v1511 = vxor.u32 %v1507, 2147483648
    %v1512 = vmul.f32 %v1511, 1.442695
    %v1513 = vpow.pop %v1512
    %v1514 = vadd.f32 %v1513, 1.0
    %v1515 = vrcp.pop %v1514
    %v1516 = vmul.f32 1.0, %v1515
    %v1517 = vxor.u32 %v1508, 2147483648
    %v1518 = vmul.f32 %v1517, 1.442695
    %v1519 = vpow.pop %v1518
    %v1520 = vadd.f32 %v1519, 1.0
    %v1521 = vrcp.pop %v1520
    %v1522 = vmul.f32 1.0, %v1521
    %v1523 = vtanh.pop %v1509
    %v1524 = vxor.u32 %v1510, 2147483648
    %v1525 = vmul.f32 %v1524, 1.442695
    %v1526 = vpow.pop %v1525
    %v1527 = vadd.f32 %v1526, 1.0
    %v1528 = vrcp.pop %v1527
    %v1529 = vmul.f32 1.0, %v1528
    %v1530 = vmul.f32 %v1522, %v1350
    %v1531 = vmul.f32 %v1516, %v1523
    %v1532 = vadd.f32 %v1530, %v1531
    %v1533 = vtanh.pop %v1532
    %v1534 = vmul.f32 %v1529, %v1533
    %vm1535 = vcmp.eq.s32.totalorder %v386, 5
    %v1536 = vsel %vm1535, 1, 0
    %1537 = vset.pattern.permute.xlu0 0
    %1538 = vperm.xlu0 %1537, %v1536
    %v1539 = vpop.permute.xlu0 %1538
    %vm1540 = vcmp.eq.s32.totalorder %v1539, 1
    %v1541 = vsel %vm1540, %v1534, %v1359
    %s1542 = scalar_lea.vmem [#allocation2], 192
    %v1543 = vld [vmem:[%s1542] sm:$0xff]
    %v1544 = vld [vmem:[%s1542 + $0x8] sm:$0xff]
    %v1545 = vld [vmem:[%s1542 + $0x10] sm:$0xff]
    %v1546 = vld [vmem:[%s1542 + $0x18] sm:$0xff]
    %1547 = vmatprep.subr.mxu0 %v392
    %1548 = vmatpush1.msra.mxu0 %v391
    %1549 = vmatprep.subr.mxu0 %v396
    %1550 = vmatpush1.msra.mxu0 %v395
    %1551 = vmatprep.subr.mxu0 %v400
    %1552 = vmatpush1.msra.mxu0 %v399
    %1553 = vmatprep.subr.mxu0 %v404
    %1554 = vmatpush1.msra.mxu0 %v403
    %1555 = vmatprep.subr.mxu0 %v408
    %1556 = vmatpush1.msra.mxu0 %v407
    %1557 = vmatprep.subr.mxu0 %v412
    %1558 = vmatpush1.msra.mxu0 %v411
    %1559 = vmatprep.subr.mxu0 %v416
    %1560 = vmatpush1.msra.mxu0 %v415
    %1561 = vmatprep.subr.mxu0 %v420
    %1562 = vmatpush1.msra.mxu0 %v419
    %1563 = vmatprep.subr.mxu0 %v424
    %1564 = vmatpush1.msra.mxu0 %v423
    %1565 = vmatprep.subr.mxu0 %v428
    %1566 = vmatpush1.msra.mxu0 %v427
    %1567 = vmatprep.subr.mxu0 %v432
    %1568 = vmatpush1.msra.mxu0 %v431
    %1569 = vmatprep.subr.mxu0 %v436
    %1570 = vmatpush1.msra.mxu0 %v435
    %1571 = vmatprep.subr.mxu0 %v440
    %1572 = vmatpush1.msra.mxu0 %v439
    %1573 = vmatprep.subr.mxu0 %v444
    %1574 = vmatpush1.msra.mxu0 %v443
    %1575 = vmatprep.subr.mxu0 %v448
    %1576 = vmatpush1.msra.mxu0 %v447
    %1577 = vmatprep.subr.mxu0 %v452
    %1578 = vmatpush1.msra.mxu0 %v451
    %1579 = vmatprep.subr.mxu0 0.0
    %1580 = vmatpush1.msra.mxu0 0.0
    %1581 = vmatprep.subr.mxu0 0.0
    %1582 = vmatpush1.msra.mxu0 0.0
    %1583 = vmatprep.subr.mxu0 0.0
    %1584 = vmatpush1.msra.mxu0 0.0
    %1585 = vmatprep.subr.mxu0 0.0
    %1586 = vmatpush1.msra.mxu0 0.0
    %1587 = vmatprep.subr.mxu0 0.0
    %1588 = vmatpush1.msra.mxu0 0.0
    %1589 = vmatprep.subr.mxu0 0.0
    %1590 = vmatpush1.msra.mxu0 0.0
    %1591 = vmatprep.subr.mxu0 0.0
    %1592 = vmatpush1.msra.mxu0 0.0
    %1593 = vmatprep.subr.mxu0 0.0
    %1594 = vmatpush1.msra.mxu0 0.0
    %1595 = vmatprep.subr.mxu0 0.0
    %1596 = vmatpush1.msra.mxu0 0.0
    %1597 = vmatprep.subr.mxu0 0.0
    %1598 = vmatpush1.msra.mxu0 0.0
    %1599 = vmatprep.subr.mxu0 0.0
    %1600 = vmatpush1.msra.mxu0 0.0
    %1601 = vmatprep.subr.mxu0 0.0
    %1602 = vmatpush1.msra.mxu0 0.0
    %1603 = vmatprep.subr.mxu0 0.0
    %1604 = vmatpush1.msra.mxu0 0.0
    %1605 = vmatprep.subr.mxu0 0.0
    %1606 = vmatpush1.msra.mxu0 0.0
    %1607 = vmatprep.subr.mxu0 0.0
    %1608 = vmatpush1.msra.mxu0 0.0
    %1609 = vmatprep.subr.mxu0 0.0
    %1610 = vmatpush1.msra.mxu0 0.0
    %1611 = vmatprep.mubr.f32.mxu0 0.0
    %1612 = vmatmul.mubr.f32.gmra.mrb[0].mxu0 %v1534
    %v1613 = vpop.f32.mrb[0].mxu0
    %v1614 = vadd.f32 0.0, %v1613
    %v1615 = vpop.f32.mrb[0].mxu0
    %v1616 = vadd.f32 0.0, %v1615
    %1617 = vdwg.mxu0
    %1618 = vmatprep.subr.mxu0 %v394
    %1619 = vmatpush1.msra.mxu0 %v393
    %1620 = vmatprep.subr.mxu0 %v398
    %1621 = vmatpush1.msra.mxu0 %v397
    %1622 = vmatprep.subr.mxu0 %v402
    %1623 = vmatpush1.msra.mxu0 %v401
    %1624 = vmatprep.subr.mxu0 %v406
    %1625 = vmatpush1.msra.mxu0 %v405
    %1626 = vmatprep.subr.mxu0 %v410
    %1627 = vmatpush1.msra.mxu0 %v409
    %1628 = vmatprep.subr.mxu0 %v414
    %1629 = vmatpush1.msra.mxu0 %v413
    %1630 = vmatprep.subr.mxu0 %v418
    %1631 = vmatpush1.msra.mxu0 %v417
    %1632 = vmatprep.subr.mxu0 %v422
    %1633 = vmatpush1.msra.mxu0 %v421
    %1634 = vmatprep.subr.mxu0 %v426
    %1635 = vmatpush1.msra.mxu0 %v425
    %1636 = vmatprep.subr.mxu0 %v430
    %1637 = vmatpush1.msra.mxu0 %v429
    %1638 = vmatprep.subr.mxu0 %v434
    %1639 = vmatpush1.msra.mxu0 %v433
    %1640 = vmatprep.subr.mxu0 %v438
    %1641 = vmatpush1.msra.mxu0 %v437
    %1642 = vmatprep.subr.mxu0 %v442
    %1643 = vmatpush1.msra.mxu0 %v441
    %1644 = vmatprep.subr.mxu0 %v446
    %1645 = vmatpush1.msra.mxu0 %v445
    %1646 = vmatprep.subr.mxu0 %v450
    %1647 = vmatpush1.msra.mxu0 %v449
    %1648 = vmatprep.subr.mxu0 %v454
    %1649 = vmatpush1.msra.mxu0 %v453
    %1650 = vmatprep.subr.mxu0 0.0
    %1651 = vmatpush1.msra.mxu0 0.0
    %1652 = vmatprep.subr.mxu0 0.0
    %1653 = vmatpush1.msra.mxu0 0.0
    %1654 = vmatprep.subr.mxu0 0.0
    %1655 = vmatpush1.msra.mxu0 0.0
    %1656 = vmatprep.subr.mxu0 0.0
    %1657 = vmatpush1.msra.mxu0 0.0
    %1658 = vmatprep.subr.mxu0 0.0
    %1659 = vmatpush1.msra.mxu0 0.0
    %1660 = vmatprep.subr.mxu0 0.0
    %1661 = vmatpush1.msra.mxu0 0.0
    %1662 = vmatprep.subr.mxu0 0.0
    %1663 = vmatpush1.msra.mxu0 0.0
    %1664 = vmatprep.subr.mxu0 0.0
    %1665 = vmatpush1.msra.mxu0 0.0
    %1666 = vmatprep.subr.mxu0 0.0
    %1667 = vmatpush1.msra.mxu0 0.0
    %1668 = vmatprep.subr.mxu0 0.0
    %1669 = vmatpush1.msra.mxu0 0.0
    %1670 = vmatprep.subr.mxu0 0.0
    %1671 = vmatpush1.msra.mxu0 0.0
    %1672 = vmatprep.subr.mxu0 0.0
    %1673 = vmatpush1.msra.mxu0 0.0
    %1674 = vmatprep.subr.mxu0 0.0
    %1675 = vmatpush1.msra.mxu0 0.0
    %1676 = vmatprep.subr.mxu0 0.0
    %1677 = vmatpush1.msra.mxu0 0.0
    %1678 = vmatprep.subr.mxu0 0.0
    %1679 = vmatpush1.msra.mxu0 0.0
    %1680 = vmatprep.subr.mxu0 0.0
    %1681 = vmatpush1.msra.mxu0 0.0
    %1682 = vmatprep.mubr.f32.mxu0 0.0
    %1683 = vmatmul.mubr.f32.gmra.mrb[0].mxu0 %v1534
    %v1684 = vpop.f32.mrb[0].mxu0
    %v1685 = vadd.f32 0.0, %v1684
    %v1686 = vpop.f32.mrb[0].mxu0
    %v1687 = vadd.f32 0.0, %v1686
    %1688 = vdwg.mxu0
    %v1689 = vadd.f32 %v1543, %v1614
    %v1690 = vadd.f32 %v1544, %v1616
    %v1691 = vadd.f32 %v1545, %v1685
    %v1692 = vadd.f32 %v1546, %v1687
    %v1693 = vxor.u32 %v1689, 2147483648
    %v1694 = vmul.f32 %v1693, 1.442695
    %v1695 = vpow.pop %v1694
    %v1696 = vadd.f32 %v1695, 1.0
    %v1697 = vrcp.pop %v1696
    %v1698 = vmul.f32 1.0, %v1697
    %v1699 = vxor.u32 %v1690, 2147483648
    %v1700 = vmul.f32 %v1699, 1.442695
    %v1701 = vpow.pop %v1700
    %v1702 = vadd.f32 %v1701, 1.0
    %v1703 = vrcp.pop %v1702
    %v1704 = vmul.f32 1.0, %v1703
    %v1705 = vtanh.pop %v1691
    %v1706 = vxor.u32 %v1692, 2147483648
    %v1707 = vmul.f32 %v1706, 1.442695
    %v1708 = vpow.pop %v1707
    %v1709 = vadd.f32 %v1708, 1.0
    %v1710 = vrcp.pop %v1709
    %v1711 = vmul.f32 1.0, %v1710
    %v1712 = vmul.f32 %v1704, %v1532
    %v1713 = vmul.f32 %v1698, %v1705
    %v1714 = vadd.f32 %v1712, %v1713
    %v1715 = vtanh.pop %v1714
    %v1716 = vmul.f32 %v1711, %v1715
    %vm1717 = vcmp.eq.s32.totalorder %v386, 6
    %v1718 = vsel %vm1717, 1, 0
    %1719 = vset.pattern.permute.xlu0 0
    %1720 = vperm.xlu0 %1719, %v1718
    %v1721 = vpop.permute.xlu0 %1720
    %vm1722 = vcmp.eq.s32.totalorder %v1721, 1
    %v1723 = vsel %vm1722, %v1716, %v1541
    %s1724 = scalar_lea.vmem [#allocation2], 224
    %v1725 = vld [vmem:[%s1724] sm:$0xff]
    %v1726 = vld [vmem:[%s1724 + $0x8] sm:$0xff]
    %v1727 = vld [vmem:[%s1724 + $0x10] sm:$0xff]
    %v1728 = vld [vmem:[%s1724 + $0x18] sm:$0xff]
    %1729 = vmatprep.subr.mxu0 %v392
    %1730 = vmatpush1.msra.mxu0 %v391
    %1731 = vmatprep.subr.mxu0 %v396
    %1732 = vmatpush1.msra.mxu0 %v395
    %1733 = vmatprep.subr.mxu0 %v400
    %1734 = vmatpush1.msra.mxu0 %v399
    %1735 = vmatprep.subr.mxu0 %v404
    %1736 = vmatpush1.msra.mxu0 %v403
    %1737 = vmatprep.subr.mxu0 %v408
    %1738 = vmatpush1.msra.mxu0 %v407
    %1739 = vmatprep.subr.mxu0 %v412
    %1740 = vmatpush1.msra.mxu0 %v411
    %1741 = vmatprep.subr.mxu0 %v416
    %1742 = vmatpush1.msra.mxu0 %v415
    %1743 = vmatprep.subr.mxu0 %v420
    %1744 = vmatpush1.msra.mxu0 %v419
    %1745 = vmatprep.subr.mxu0 %v424
    %1746 = vmatpush1.msra.mxu0 %v423
    %1747 = vmatprep.subr.mxu0 %v428
    %1748 = vmatpush1.msra.mxu0 %v427
    %1749 = vmatprep.subr.mxu0 %v432
    %1750 = vmatpush1.msra.mxu0 %v431
    %1751 = vmatprep.subr.mxu0 %v436
    %1752 = vmatpush1.msra.mxu0 %v435
    %1753 = vmatprep.subr.mxu0 %v440
    %1754 = vmatpush1.msra.mxu0 %v439
    %1755 = vmatprep.subr.mxu0 %v444
    %1756 = vmatpush1.msra.mxu0 %v443
    %1757 = vmatprep.subr.mxu0 %v448
    %1758 = vmatpush1.msra.mxu0 %v447
    %1759 = vmatprep.subr.mxu0 %v452
    %1760 = vmatpush1.msra.mxu0 %v451
    %1761 = vmatprep.subr.mxu0 0.0
    %1762 = vmatpush1.msra.mxu0 0.0
    %1763 = vmatprep.subr.mxu0 0.0
    %1764 = vmatpush1.msra.mxu0 0.0
    %1765 = vmatprep.subr.mxu0 0.0
    %1766 = vmatpush1.msra.mxu0 0.0
    %1767 = vmatprep.subr.mxu0 0.0
    %1768 = vmatpush1.msra.mxu0 0.0
    %1769 = vmatprep.subr.mxu0 0.0
    %1770 = vmatpush1.msra.mxu0 0.0
    %1771 = vmatprep.subr.mxu0 0.0
    %1772 = vmatpush1.msra.mxu0 0.0
    %1773 = vmatprep.subr.mxu0 0.0
    %1774 = vmatpush1.msra.mxu0 0.0
    %1775 = vmatprep.subr.mxu0 0.0
    %1776 = vmatpush1.msra.mxu0 0.0
    %1777 = vmatprep.subr.mxu0 0.0
    %1778 = vmatpush1.msra.mxu0 0.0
    %1779 = vmatprep.subr.mxu0 0.0
    %1780 = vmatpush1.msra.mxu0 0.0
    %1781 = vmatprep.subr.mxu0 0.0
    %1782 = vmatpush1.msra.mxu0 0.0
    %1783 = vmatprep.subr.mxu0 0.0
    %1784 = vmatpush1.msra.mxu0 0.0
    %1785 = vmatprep.subr.mxu0 0.0
    %1786 = vmatpush1.msra.mxu0 0.0
    %1787 = vmatprep.subr.mxu0 0.0
    %1788 = vmatpush1.msra.mxu0 0.0
    %1789 = vmatprep.subr.mxu0 0.0
    %1790 = vmatpush1.msra.mxu0 0.0
    %1791 = vmatprep.subr.mxu0 0.0
    %1792 = vmatpush1.msra.mxu0 0.0
    %1793 = vmatprep.mubr.f32.mxu0 0.0
    %1794 = vmatmul.mubr.f32.gmra.mrb[0].mxu0 %v1716
    %v1795 = vpop.f32.mrb[0].mxu0
    %v1796 = vadd.f32 0.0, %v1795
    %v1797 = vpop.f32.mrb[0].mxu0
    %v1798 = vadd.f32 0.0, %v1797
    %1799 = vdwg.mxu0
    %1800 = vmatprep.subr.mxu0 %v394
    %1801 = vmatpush1.msra.mxu0 %v393
    %1802 = vmatprep.subr.mxu0 %v398
    %1803 = vmatpush1.msra.mxu0 %v397
    %1804 = vmatprep.subr.mxu0 %v402
    %1805 = vmatpush1.msra.mxu0 %v401
    %1806 = vmatprep.subr.mxu0 %v406
    %1807 = vmatpush1.msra.mxu0 %v405
    %1808 = vmatprep.subr.mxu0 %v410
    %1809 = vmatpush1.msra.mxu0 %v409
    %1810 = vmatprep.subr.mxu0 %v414
    %1811 = vmatpush1.msra.mxu0 %v413
    %1812 = vmatprep.subr.mxu0 %v418
    %1813 = vmatpush1.msra.mxu0 %v417
    %1814 = vmatprep.subr.mxu0 %v422
    %1815 = vmatpush1.msra.mxu0 %v421
    %1816 = vmatprep.subr.mxu0 %v426
    %1817 = vmatpush1.msra.mxu0 %v425
    %1818 = vmatprep.subr.mxu0 %v430
    %1819 = vmatpush1.msra.mxu0 %v429
    %1820 = vmatprep.subr.mxu0 %v434
    %1821 = vmatpush1.msra.mxu0 %v433
    %1822 = vmatprep.subr.mxu0 %v438
    %1823 = vmatpush1.msra.mxu0 %v437
    %1824 = vmatprep.subr.mxu0 %v442
    %1825 = vmatpush1.msra.mxu0 %v441
    %1826 = vmatprep.subr.mxu0 %v446
    %1827 = vmatpush1.msra.mxu0 %v445
    %1828 = vmatprep.subr.mxu0 %v450
    %1829 = vmatpush1.msra.mxu0 %v449
    %1830 = vmatprep.subr.mxu0 %v454
    %1831 = vmatpush1.msra.mxu0 %v453
    %1832 = vmatprep.subr.mxu0 0.0
    %1833 = vmatpush1.msra.mxu0 0.0
    %1834 = vmatprep.subr.mxu0 0.0
    %1835 = vmatpush1.msra.mxu0 0.0
    %1836 = vmatprep.subr.mxu0 0.0
    %1837 = vmatpush1.msra.mxu0 0.0
    %1838 = vmatprep.subr.mxu0 0.0
    %1839 = vmatpush1.msra.mxu0 0.0
    %1840 = vmatprep.subr.mxu0 0.0
    %1841 = vmatpush1.msra.mxu0 0.0
    %1842 = vmatprep.subr.mxu0 0.0
    %1843 = vmatpush1.msra.mxu0 0.0
    %1844 = vmatprep.subr.mxu0 0.0
    %1845 = vmatpush1.msra.mxu0 0.0
    %1846 = vmatprep.subr.mxu0 0.0
    %1847 = vmatpush1.msra.mxu0 0.0
    %1848 = vmatprep.subr.mxu0 0.0
    %1849 = vmatpush1.msra.mxu0 0.0
    %1850 = vmatprep.subr.mxu0 0.0
    %1851 = vmatpush1.msra.mxu0 0.0
    %1852 = vmatprep.subr.mxu0 0.0
    %1853 = vmatpush1.msra.mxu0 0.0
    %1854 = vmatprep.subr.mxu0 0.0
    %1855 = vmatpush1.msra.mxu0 0.0
    %1856 = vmatprep.subr.mxu0 0.0
    %1857 = vmatpush1.msra.mxu0 0.0
    %1858 = vmatprep.subr.mxu0 0.0
    %1859 = vmatpush1.msra.mxu0 0.0
    %1860 = vmatprep.subr.mxu0 0.0
    %1861 = vmatpush1.msra.mxu0 0.0
    %1862 = vmatprep.subr.mxu0 0.0
    %1863 = vmatpush1.msra.mxu0 0.0
    %1864 = vmatprep.mubr.f32.mxu0 0.0
    %1865 = vmatmul.mubr.f32.gmra.mrb[0].mxu0 %v1716
    %v1866 = vpop.f32.mrb[0].mxu0
    %v1867 = vadd.f32 0.0, %v1866
    %v1868 = vpop.f32.mrb[0].mxu0
    %v1869 = vadd.f32 0.0, %v1868
    %1870 = vdwg.mxu0
    %v1871 = vadd.f32 %v1725, %v1796
    %v1872 = vadd.f32 %v1726, %v1798
    %v1873 = vadd.f32 %v1727, %v1867
    %v1874 = vadd.f32 %v1728, %v1869
    %v1875 = vxor.u32 %v1871, 2147483648
    %v1876 = vmul.f32 %v1875, 1.442695
    %v1877 = vpow.pop %v1876
    %v1878 = vadd.f32 %v1877, 1.0
    %v1879 = vrcp.pop %v1878
    %v1880 = vmul.f32 1.0, %v1879
    %v1881 = vxor.u32 %v1872, 2147483648
    %v1882 = vmul.f32 %v1881, 1.442695
    %v1883 = vpow.pop %v1882
    %v1884 = vadd.f32 %v1883, 1.0
    %v1885 = vrcp.pop %v1884
    %v1886 = vmul.f32 1.0, %v1885
    %v1887 = vtanh.pop %v1873
    %v1888 = vxor.u32 %v1874, 2147483648
    %v1889 = vmul.f32 %v1888, 1.442695
    %v1890 = vpow.pop %v1889
    %v1891 = vadd.f32 %v1890, 1.0
    %v1892 = vrcp.pop %v1891
    %v1893 = vmul.f32 1.0, %v1892
    %v1894 = vmul.f32 %v1886, %v1714
    %v1895 = vmul.f32 %v1880, %v1887
    %v1896 = vadd.f32 %v1894, %v1895
    %v1897 = vtanh.pop %v1896
    %v1898 = vmul.f32 %v1893, %v1897
    %vm1899 = vcmp.eq.s32.totalorder %v386, 7
    %v1900 = vsel %vm1899, 1, 0
    %1901 = vset.pattern.permute.xlu0 0
    %1902 = vperm.xlu0 %1901, %v1900
    %v1903 = vpop.permute.xlu0 %1902
    %vm1904 = vcmp.eq.s32.totalorder %v1903, 1
    %v1905 = vsel %vm1904, %v1898, %v1723
    %v1906 = vld [vmem:[#allocation6] sm:$0xff]
    %v1907 = vld [vmem:[#allocation6 + $0x8] sm:$0xff]
    %v1908 = vld [vmem:[#allocation6 + $0x10] sm:$0xff]
    %v1909 = vld [vmem:[#allocation6 + $0x18] sm:$0xff]
    %v1910 = vld [vmem:[#allocation6 + $0x20] sm:$0xff]
    %v1911 = vld [vmem:[#allocation6 + $0x28] sm:$0xff]
    %v1912 = vld [vmem:[#allocation6 + $0x30] sm:$0xff]
    %v1913 = vld [vmem:[#allocation6 + $0x38] sm:$0xff]
    %v1914 = vld [vmem:[#allocation6 + $0x40] sm:$0xff]
    %v1915 = vld [vmem:[#allocation6 + $0x48] sm:$0xff]
    %v1916 = vld [vmem:[#allocation6 + $0x50] sm:$0xff]
    %v1917 = vld [vmem:[#allocation6 + $0x58] sm:$0xff]
    %v1918 = vld [vmem:[#allocation6 + $0x60] sm:$0xff]
    %v1919 = vld [vmem:[#allocation6 + $0x68] sm:$0xff]
    %v1920 = vld [vmem:[#allocation6 + $0x70] sm:$0xff]
    %v1921 = vld [vmem:[#allocation6 + $0x78] sm:$0xff]
    %v1922 = vld [vmem:[%s6] sm:$0x1]
    %v1924 = vlaneseq
    %v1925 = vshrl.u32 %v1924, 7
    %v1926 = vsub.s32 0, %v1925
    %v1927 = vrot.slane %v1922, %v1926
    %1929 = vmatprep.subr.mxu0 0.0
    %1930 = vmatpush1.msra.mxu0 %v1906
    %1931 = vmatprep.subr.mxu0 0.0
    %1932 = vmatpush1.msra.mxu0 %v1907
    %1933 = vmatprep.subr.mxu0 0.0
    %1934 = vmatpush1.msra.mxu0 %v1908
    %1935 = vmatprep.subr.mxu0 0.0
    %1936 = vmatpush1.msra.mxu0 %v1909
    %1937 = vmatprep.subr.mxu0 0.0
    %1938 = vmatpush1.msra.mxu0 %v1910
    %1939 = vmatprep.subr.mxu0 0.0
    %1940 = vmatpush1.msra.mxu0 %v1911
    %1941 = vmatprep.subr.mxu0 0.0
    %1942 = vmatpush1.msra.mxu0 %v1912
    %1943 = vmatprep.subr.mxu0 0.0
    %1944 = vmatpush1.msra.mxu0 %v1913
    %1945 = vmatprep.subr.mxu0 0.0
    %1946 = vmatpush1.msra.mxu0 %v1914
    %1947 = vmatprep.subr.mxu0 0.0
    %1948 = vmatpush1.msra.mxu0 %v1915
    %1949 = vmatprep.subr.mxu0 0.0
    %1950 = vmatpush1.msra.mxu0 %v1916
    %1951 = vmatprep.subr.mxu0 0.0
    %1952 = vmatpush1.msra.mxu0 %v1917
    %1953 = vmatprep.subr.mxu0 0.0
    %1954 = vmatpush1.msra.mxu0 %v1918
    %1955 = vmatprep.subr.mxu0 0.0
    %1956 = vmatpush1.msra.mxu0 %v1919
    %1957 = vmatprep.subr.mxu0 0.0
    %1958 = vmatpush1.msra.mxu0 %v1920
    %1959 = vmatprep.subr.mxu0 0.0
    %1960 = vmatpush1.msra.mxu0 %v1921
    %1961 = vmatprep.subr.mxu0 0.0
    %1962 = vmatpush1.msra.mxu0 0.0
    %1963 = vmatprep.subr.mxu0 0.0
    %1964 = vmatpush1.msra.mxu0 0.0
    %1965 = vmatprep.subr.mxu0 0.0
    %1966 = vmatpush1.msra.mxu0 0.0
    %1967 = vmatprep.subr.mxu0 0.0
    %1968 = vmatpush1.msra.mxu0 0.0
    %1969 = vmatprep.subr.mxu0 0.0
    %1970 = vmatpush1.msra.mxu0 0.0
    %1971 = vmatprep.subr.mxu0 0.0
    %1972 = vmatpush1.msra.mxu0 0.0
    %1973 = vmatprep.subr.mxu0 0.0
    %1974 = vmatpush1.msra.mxu0 0.0
    %1975 = vmatprep.subr.mxu0 0.0
    %1976 = vmatpush1.msra.mxu0 0.0
    %1977 = vmatprep.subr.mxu0 0.0
    %1978 = vmatpush1.msra.mxu0 0.0
    %1979 = vmatprep.subr.mxu0 0.0
    %1980 = vmatpush1.msra.mxu0 0.0
    %1981 = vmatprep.subr.mxu0 0.0
    %1982 = vmatpush1.msra.mxu0 0.0
    %1983 = vmatprep.subr.mxu0 0.0
    %1984 = vmatpush1.msra.mxu0 0.0
    %1985 = vmatprep.subr.mxu0 0.0
    %1986 = vmatpush1.msra.mxu0 0.0
    %1987 = vmatprep.subr.mxu0 0.0
    %1988 = vmatpush1.msra.mxu0 0.0
    %1989 = vmatprep.subr.mxu0 0.0
    %1990 = vmatpush1.msra.mxu0 0.0
    %1991 = vmatprep.subr.mxu0 0.0
    %1992 = vmatpush1.msra.mxu0 0.0
    %1993 = vmatprep.mubr.f32.mxu0 0.0
    %1994 = vmatmul.mubr.f32.gmra.mrb[0].mxu0 %v1905
    %v1995 = vpop.f32.mrb[0].mxu0
    %v1996 = vadd.f32 %v1927, %v1995
    %v1997 = vpop.f32.mrb[0].mxu0
    %1998 = vdwg.mxu0
    %1999 = vst [vmem:[#allocation8] sm:$0xff] %v1996
    // Predicated region
    $region38: #{tpu_custom_call.1} parent=1 // pred_check
      _
    $region39: #{tpu_custom_call.1} parent=1 // pred_check_branch
      %2001 = sbr.rel (0) target = $region41
    $region40: #{tpu_custom_call.1} parent=1 // pred_region
      %s2003 = ssub.s32 128, 128
      %2004 = vsyncadd [#allocation5], %s2003
      %s2006 = sshll.u32 [#allocation8], 4
      %s2007 = int_to_ptr.vmem [resolvable:$true] %s2006
      %2009 = dma.vmem_to_hbm [thread:$0]  %s2007, 128, %s7, [#allocation5]
    $region41: #{tpu_custom_call.1} parent=1 // pred_fallthru
      _
    // Predicated region
    $region42: #{tpu_custom_call.1} parent=1 // pred_check
      _
    $region43: #{tpu_custom_call.1} parent=1 // pred_check_branch
      %2011 = sbr.rel (0) target = $region45
    $region44: #{tpu_custom_call.1} parent=1 // pred_region
      %2012 = dma.done [#allocation5], 128
    $region45: #{tpu_custom_call.1} parent=1 // pred_fallthru
      _
    %2013 = vsyncpa [#allocation4], 1
    %2014 = vsyncpa [#allocation7], 1
    %2015 = vsyncpa [#allocation5], 1

</llo_original>
